<compile_context>
chip_gen: v7x
topology: tpu7x:2x2x1
jax: 0.10.0
libtpu: 0.0.40
codegen_flags: <defaults>
</compile_context>

<pallas_src>
import jax
import jax.numpy as jnp
from jax.experimental import pallas as pl
from jax.experimental.pallas import tpu as pltpu


def _lstm_kernel(x_ref, wih_ref, whh_ref, b_ref, wl_ref, bl_ref, out_ref, xw_ref):
    B_t, T, F = x_ref.shape
    H4 = whh_ref.shape[1]
    H = H4 // 4

    # ---- Prologue: input projection for ALL timesteps in one matmul. ------
    # (B_t*T, F) @ (F, 4H) + b  ->  VMEM scratch (B_t, T, 4H).
    # (i/f/o columns of the weights & bias are pre-scaled by 0.5, see packer.)
    x_flat = x_ref[...].reshape(B_t * T, F)
    xw_ref[...] = (
        jnp.dot(x_flat, wih_ref[...], preferred_element_type=jnp.float32)
        + b_ref[...]
    ).reshape(B_t, T, H4)

    whh = whh_ref[...]                        # (H, 4H) stays resident in vregs

    def step(gates_in, h, c):
        gates = jnp.dot(h, whh, preferred_element_type=jnp.float32) + gates_in
        th = jnp.tanh(gates)                  # ONE wide EUP pass over 4H lanes
        # sigmoid(z) == 0.5 * tanh(z/2) + 0.5 ; i/f/o inputs were pre-halved.
        i = 0.5 * th[:, 0 * H:1 * H] + 0.5    # input gate
        f = 0.5 * th[:, 1 * H:2 * H] + 0.5    # forget gate
        g = th[:, 2 * H:3 * H]                # cell candidate (true tanh)
        o = 0.5 * th[:, 3 * H:4 * H] + 0.5    # output gate
        c = f * c + i * g
        h = o * jnp.tanh(c)
        return h, c

    h = jnp.zeros((B_t, H), jnp.float32)
    c = jnp.zeros((B_t, H), jnp.float32)

    if T <= 16:
        # Small T: full static unroll; per-step xw loads come from VMEM
        # scratch so live ranges stay short.
        for t in range(T):
            h, c = step(xw_ref[:, t, :], h, c)
    else:
        # Larger T: bounded code size / vreg pressure, LLO still sees an
        # unrolled window.
        def body(t, carry):
            h, c = carry
            g_in = xw_ref[:, pl.ds(t, 1), :].reshape(B_t, H4)
            return step(g_in, h, c)

        h, c = jax.lax.fori_loop(0, T, body, (h, c), unroll=4)

    # ---- Linear head, lane-dense output: (1, H) @ (H, B_t) -> (1, B_t). ----
    h_t = jnp.transpose(h)                                        # (H, B_t)
    head = jnp.dot(wl_ref[...], h_t, preferred_element_type=jnp.float32) + bl_ref[0]
    out_ref[...] = head.reshape(1, 1, B_t)


def _round_up(a, m):
    return ((a + m - 1) // m) * m


def shallow_regression_lstm(x, kparams, *, block_b=None):
    """x: (B, T, F) float32.  kparams: packed kernel params.  Returns (B,)."""
    B, T, F = x.shape
    H4 = kparams["whh_t"].shape[1]
    H = H4 // 4

    # --- Batch tile: multiple of 8, capped so x-tile + xw-scratch fit VMEM. ---
    if block_b is None:
        block_b = min(256, _round_up(B, 8))
        per_row_bytes = 4 * (2 * T * F + T * H4)     # x (double buf) + xw scratch
        budget = 16 * 1024 * 1024
        while block_b > 8 and block_b * per_row_bytes > budget:
            block_b //= 2
        block_b = max(8, _round_up(block_b, 8))
    B_pad = _round_up(B, block_b)
    nb = B_pad // block_b
    if B_pad != B:
        # Zero-padded rows produce harmless values that are sliced off below.
        x = jnp.pad(x, ((0, B_pad - B), (0, 0), (0, 0)))

    est_bytes = 4 * (2 * block_b * T * F           # x tile, double-buffered
                     + block_b * T * H4            # xw scratch
                     + (F + H + 1) * H4 + H        # weights + biases
                     + 2 * block_b)                # output tile
    vmem_limit = int(min(max(2 * est_bytes, 32 * 1024 * 1024), 64 * 1024 * 1024))

    out = pl.pallas_call(
        _lstm_kernel,
        out_shape=jax.ShapeDtypeStruct((nb, 1, block_b), jnp.float32),
        grid=(nb,),
        in_specs=[
            pl.BlockSpec((block_b, T, F), lambda b: (b, 0, 0)),   # x tile
            pl.BlockSpec((F, H4), lambda b: (0, 0)),              # W_ih^T (resident)
            pl.BlockSpec((H, H4), lambda b: (0, 0)),              # W_hh^T (resident)
            pl.BlockSpec((1, H4), lambda b: (0, 0)),              # folded gate bias
            pl.BlockSpec((1, H), lambda b: (0, 0)),               # W_lin
            pl.BlockSpec(memory_space=pltpu.MemorySpace.SMEM),    # b_lin scalar
        ],
        out_specs=pl.BlockSpec((1, 1, block_b), lambda b: (b, 0, 0)),
        scratch_shapes=[pltpu.VMEM((block_b, T, H4), jnp.float32)],
        compiler_params=pltpu.CompilerParams(
            dimension_semantics=("parallel",),
            vmem_limit_bytes=vmem_limit,
        ),
    )(x, kparams["wih_t"], kparams["whh_t"], kparams["b"],
      kparams["wl"], kparams["bl"])

    return out.reshape(B_pad)[:B]                                 # flatten -> (B,)


def init_params(key, num_features, hidden_units):
    """PyTorch-layout params with U(-1/sqrt(H), 1/sqrt(H)) init."""
    H, F = hidden_units, num_features
    k = 1.0 / jnp.sqrt(jnp.float32(H))
    keys = jax.random.split(key, 6)
    return {
        "w_ih": jax.random.uniform(keys[0], (4 * H, F), jnp.float32, -k, k),
        "w_hh": jax.random.uniform(keys[1], (4 * H, H), jnp.float32, -k, k),
        "b_ih": jax.random.uniform(keys[2], (4 * H,), jnp.float32, -k, k),
        "b_hh": jax.random.uniform(keys[3], (4 * H,), jnp.float32, -k, k),
        "w_lin": jax.random.uniform(keys[4], (1, H), jnp.float32, -k, k),
        "b_lin": jax.random.uniform(keys[5], (1,), jnp.float32, -k, k),
    }


def pack_kernel_params(raw):
    """Kernel layout: transposed weights, folded bias, i/f/o columns halved so
    a single tanh reproduces the sigmoids (sigmoid(z) = 0.5*tanh(z/2) + 0.5)."""
    H4 = raw["w_ih"].shape[0]
    H = H4 // 4
    gate_scale = jnp.concatenate([
        jnp.full((2 * H,), 0.5, jnp.float32),   # i, f  -> sigmoid via tanh
        jnp.ones((H,), jnp.float32),            # g     -> true tanh
        jnp.full((H,), 0.5, jnp.float32),       # o     -> sigmoid via tanh
    ])
    return {
        "wih_t": raw["w_ih"].T * gate_scale[None, :],                  # (F, 4H)
        "whh_t": raw["w_hh"].T * gate_scale[None, :],                  # (H, 4H)
        "b": ((raw["b_ih"] + raw["b_hh"]) * gate_scale)[None, :],      # (1, 4H)
        "wl": raw["w_lin"],                                            # (1, H)
        "bl": raw["b_lin"],                                            # (1,)
    }


def _reference(x, raw):
    """Pure-JAX reference (lax.scan over time), PyTorch gate order i,f,g,o."""
    B, T, F = x.shape
    H = raw["w_hh"].shape[1]
    wih_t, whh_t = raw["w_ih"].T, raw["w_hh"].T
    b = (raw["b_ih"] + raw["b_hh"])[None, :]
    h0 = jnp.zeros((B, H), jnp.float32)
    c0 = jnp.zeros((B, H), jnp.float32)

    def step(carry, x_t):
        h, c = carry
        z = x_t @ wih_t + h @ whh_t + b
        i = jax.nn.sigmoid(z[:, 0:H])
        f = jax.nn.sigmoid(z[:, H:2 * H])
        g = jnp.tanh(z[:, 2 * H:3 * H])
        o = jax.nn.sigmoid(z[:, 3 * H:4 * H])
        c = f * c + i * g
        h = o * jnp.tanh(c)
        return (h, c), None

    (h, _), _ = jax.lax.scan(step, (h0, c0), jnp.transpose(x, (1, 0, 2)))
    return jnp.sum(h * raw["w_lin"], axis=-1) + raw["b_lin"][0]


if __name__ == "__main__":
    B, T, F, H = 2, 8, 4, 32

    key = jax.random.PRNGKey(0)
    kx, kp = jax.random.split(key)
    x = jax.random.normal(kx, (B, T, F), dtype=jnp.float32)
    raw_params = init_params(kp, num_features=F, hidden_units=H)
    kparams = pack_kernel_params(raw_params)

    out = shallow_regression_lstm(x, kparams)
    out = jax.block_until_ready(out)

    ref = _reference(x, raw_params)
    assert out.shape == (B,), out.shape
    assert jnp.allclose(out, ref, atol=1e-4, rtol=1e-4), (out, ref)

    print("KERNEL_OK")
</pallas_src>

<mosaic_0001>
module attributes {stable_mosaic.version = 11 : i64} {
  func.func @_lstm_kernel(%arg0: i32, %arg1: memref<8x8x4xf32, #tpu.memory_space<vmem>>, %arg2: memref<4x128xf32, #tpu.memory_space<vmem>>, %arg3: memref<32x128xf32, #tpu.memory_space<vmem>>, %arg4: memref<1x128xf32, #tpu.memory_space<vmem>>, %arg5: memref<1x32xf32, #tpu.memory_space<vmem>>, %arg6: memref<1xf32, #tpu.memory_space<smem>>, %arg7: memref<1x1x8xf32, #tpu.memory_space<vmem>>, %arg8: memref<8x8x128xf32, #tpu.memory_space<vmem>>) attributes {dimension_semantics = [#tpu.dimension_semantics<parallel>], iteration_bounds = array<i64: 1>, scalar_prefetch = 0 : i64, scratch_operands = 1 : i64, tpu.core_type = #tpu.core_type<tc>, window_params = [{transform_indices = @transform_0, window_bounds = array<i64: 8, 8, 4>}, {pipeline_mode = #tpu.pipeline_mode<synchronous>, transform_indices = @transform_1, window_bounds = array<i64: 4, 128>}, {pipeline_mode = #tpu.pipeline_mode<synchronous>, transform_indices = @transform_2, window_bounds = array<i64: 32, 128>}, {pipeline_mode = #tpu.pipeline_mode<synchronous>, transform_indices = @transform_3, window_bounds = array<i64: 1, 128>}, {pipeline_mode = #tpu.pipeline_mode<synchronous>, transform_indices = @transform_4, window_bounds = array<i64: 1, 32>}, {transform_indices = @transform_5, window_bounds = array<i64: 1>}, {transform_indices = @transform_6, window_bounds = array<i64: 1, 1, 8>}]} {
    %c0 = arith.constant 0 : index
    %c0_0 = arith.constant 0 : index
    %c0_1 = arith.constant 0 : index
    %0 = vector.load %arg1[%c0, %c0_0, %c0_1] : memref<8x8x4xf32, #tpu.memory_space<vmem>>, vector<8x8x4xf32>
    %1 = vector.shape_cast %0 : vector<8x8x4xf32> to vector<64x4xf32>
    %c0_2 = arith.constant 0 : index
    %c0_3 = arith.constant 0 : index
    %2 = vector.load %arg2[%c0_2, %c0_3] : memref<4x128xf32, #tpu.memory_space<vmem>>, vector<4x128xf32>
    %cst = arith.constant dense<0.000000e+00> : vector<64x128xf32>
    %3 = tpu.matmul %1, %2, %cst {dimension_numbers = #tpu.dot_dimension_numbers<[1], [0], [0], [1], [0, 0, 1, 1], [], []>} : vector<64x4xf32>, vector<4x128xf32>, vector<64x128xf32> -> vector<64x128xf32>
    %c0_4 = arith.constant 0 : index
    %c0_5 = arith.constant 0 : index
    %4 = vector.load %arg4[%c0_4, %c0_5] : memref<1x128xf32, #tpu.memory_space<vmem>>, vector<1x128xf32>
    %5 = vector.broadcast %4 : vector<1x128xf32> to vector<64x128xf32>
    %6 = arith.addf %3, %5 : vector<64x128xf32>
    %7 = vector.shape_cast %6 : vector<64x128xf32> to vector<8x8x128xf32>
    %c0_6 = arith.constant 0 : index
    %c0_7 = arith.constant 0 : index
    %c0_8 = arith.constant 0 : index
    %8 = vector.load %arg8[%c0_6, %c0_7, %c0_8] : memref<8x8x128xf32, #tpu.memory_space<vmem>>, vector<8x8x128xf32>
    tpu.vector_store %arg8[%c0_6, %c0_7, %c0_8], %7 {strides = array<i32>} : memref<8x8x128xf32, #tpu.memory_space<vmem>>, vector<8x8x128xf32>,
    %c0_9 = arith.constant 0 : index
    %c0_10 = arith.constant 0 : index
    %9 = vector.load %arg3[%c0_9, %c0_10] : memref<32x128xf32, #tpu.memory_space<vmem>>, vector<32x128xf32>
    %cst_11 = arith.constant 0.000000e+00 : f32
    %10 = vector.broadcast %cst_11 : f32 to vector<8x32xf32>
    %cst_12 = arith.constant 0.000000e+00 : f32
    %11 = vector.broadcast %cst_12 : f32 to vector<8x32xf32>
    %c0_13 = arith.constant 0 : index
    %c0_14 = arith.constant 0 : index
    %c0_15 = arith.constant 0 : index
    %12 = vector.load %arg8[%c0_13, %c0_14, %c0_15] : memref<8x8x128xf32, #tpu.memory_space<vmem>>, vector<8x1x128xf32>
    %13 = vector.shape_cast %12 : vector<8x1x128xf32> to vector<8x128xf32>
    %cst_16 = arith.constant dense<0.000000e+00> : vector<8x128xf32>
    %14 = tpu.matmul %10, %9, %cst_16 {dimension_numbers = #tpu.dot_dimension_numbers<[1], [0], [0], [1], [0, 0, 1, 1], [], []>} : vector<8x32xf32>, vector<32x128xf32>, vector<8x128xf32> -> vector<8x128xf32>
    %15 = arith.addf %14, %13 : vector<8x128xf32>
    %16 = math.tanh %15 : vector<8x128xf32>
    %17 = vector.extract_strided_slice %16 {offsets = [0, 0], sizes = [8, 32], strides = [1, 1]} : vector<8x128xf32> to vector<8x32xf32>
    %cst_17 = arith.constant 5.000000e-01 : f32
    %18 = vector.broadcast %cst_17 : f32 to vector<8x32xf32>
    %19 = arith.mulf %18, %17 : vector<8x32xf32>
    %cst_18 = arith.constant 5.000000e-01 : f32
    %20 = vector.broadcast %cst_18 : f32 to vector<8x32xf32>
    %21 = arith.addf %19, %20 : vector<8x32xf32>
    %22 = vector.extract_strided_slice %16 {offsets = [0, 32], sizes = [8, 32], strides = [1, 1]} : vector<8x128xf32> to vector<8x32xf32>
    %cst_19 = arith.constant 5.000000e-01 : f32
    %23 = vector.broadcast %cst_19 : f32 to vector<8x32xf32>
    %24 = arith.mulf %23, %22 : vector<8x32xf32>
    %cst_20 = arith.constant 5.000000e-01 : f32
    %25 = vector.broadcast %cst_20 : f32 to vector<8x32xf32>
    %26 = arith.addf %24, %25 : vector<8x32xf32>
    %27 = vector.extract_strided_slice %16 {offsets = [0, 64], sizes = [8, 32], strides = [1, 1]} : vector<8x128xf32> to vector<8x32xf32>
    %28 = vector.extract_strided_slice %16 {offsets = [0, 96], sizes = [8, 32], strides = [1, 1]} : vector<8x128xf32> to vector<8x32xf32>
    %cst_21 = arith.constant 5.000000e-01 : f32
    %29 = vector.broadcast %cst_21 : f32 to vector<8x32xf32>
    %30 = arith.mulf %29, %28 : vector<8x32xf32>
    %cst_22 = arith.constant 5.000000e-01 : f32
    %31 = vector.broadcast %cst_22 : f32 to vector<8x32xf32>
    %32 = arith.addf %30, %31 : vector<8x32xf32>
    %33 = arith.mulf %26, %11 : vector<8x32xf32>
    %34 = arith.mulf %21, %27 : vector<8x32xf32>
    %35 = arith.addf %33, %34 : vector<8x32xf32>
    %36 = math.tanh %35 : vector<8x32xf32>
    %37 = arith.mulf %32, %36 : vector<8x32xf32>
    %c0_23 = arith.constant 0 : index
    %c1 = arith.constant 1 : index
    %c0_24 = arith.constant 0 : index
    %38 = vector.load %arg8[%c0_23, %c1, %c0_24] : memref<8x8x128xf32, #tpu.memory_space<vmem>>, vector<8x1x128xf32>
    %39 = vector.shape_cast %38 : vector<8x1x128xf32> to vector<8x128xf32>
    %cst_25 = arith.constant dense<0.000000e+00> : vector<8x128xf32>
    %40 = tpu.matmul %37, %9, %cst_25 {dimension_numbers = #tpu.dot_dimension_numbers<[1], [0], [0], [1], [0, 0, 1, 1], [], []>} : vector<8x32xf32>, vector<32x128xf32>, vector<8x128xf32> -> vector<8x128xf32>
    %41 = arith.addf %40, %39 : vector<8x128xf32>
    %42 = math.tanh %41 : vector<8x128xf32>
    %43 = vector.extract_strided_slice %42 {offsets = [0, 0], sizes = [8, 32], strides = [1, 1]} : vector<8x128xf32> to vector<8x32xf32>
    %cst_26 = arith.constant 5.000000e-01 : f32
    %44 = vector.broadcast %cst_26 : f32 to vector<8x32xf32>
    %45 = arith.mulf %44, %43 : vector<8x32xf32>
    %cst_27 = arith.constant 5.000000e-01 : f32
    %46 = vector.broadcast %cst_27 : f32 to vector<8x32xf32>
    %47 = arith.addf %45, %46 : vector<8x32xf32>
    %48 = vector.extract_strided_slice %42 {offsets = [0, 32], sizes = [8, 32], strides = [1, 1]} : vector<8x128xf32> to vector<8x32xf32>
    %cst_28 = arith.constant 5.000000e-01 : f32
    %49 = vector.broadcast %cst_28 : f32 to vector<8x32xf32>
    %50 = arith.mulf %49, %48 : vector<8x32xf32>
    %cst_29 = arith.constant 5.000000e-01 : f32
    %51 = vector.broadcast %cst_29 : f32 to vector<8x32xf32>
    %52 = arith.addf %50, %51 : vector<8x32xf32>
    %53 = vector.extract_strided_slice %42 {offsets = [0, 64], sizes = [8, 32], strides = [1, 1]} : vector<8x128xf32> to vector<8x32xf32>
    %54 = vector.extract_strided_slice %42 {offsets = [0, 96], sizes = [8, 32], strides = [1, 1]} : vector<8x128xf32> to vector<8x32xf32>
    %cst_30 = arith.constant 5.000000e-01 : f32
    %55 = vector.broadcast %cst_30 : f32 to vector<8x32xf32>
    %56 = arith.mulf %55, %54 : vector<8x32xf32>
    %cst_31 = arith.constant 5.000000e-01 : f32
    %57 = vector.broadcast %cst_31 : f32 to vector<8x32xf32>
    %58 = arith.addf %56, %57 : vector<8x32xf32>
    %59 = arith.mulf %52, %35 : vector<8x32xf32>
    %60 = arith.mulf %47, %53 : vector<8x32xf32>
    %61 = arith.addf %59, %60 : vector<8x32xf32>
    %62 = math.tanh %61 : vector<8x32xf32>
    %63 = arith.mulf %58, %62 : vector<8x32xf32>
    %c0_32 = arith.constant 0 : index
    %c2 = arith.constant 2 : index
    %c0_33 = arith.constant 0 : index
    %64 = vector.load %arg8[%c0_32, %c2, %c0_33] : memref<8x8x128xf32, #tpu.memory_space<vmem>>, vector<8x1x128xf32>
    %65 = vector.shape_cast %64 : vector<8x1x128xf32> to vector<8x128xf32>
    %cst_34 = arith.constant dense<0.000000e+00> : vector<8x128xf32>
    %66 = tpu.matmul %63, %9, %cst_34 {dimension_numbers = #tpu.dot_dimension_numbers<[1], [0], [0], [1], [0, 0, 1, 1], [], []>} : vector<8x32xf32>, vector<32x128xf32>, vector<8x128xf32> -> vector<8x128xf32>
    %67 = arith.addf %66, %65 : vector<8x128xf32>
    %68 = math.tanh %67 : vector<8x128xf32>
    %69 = vector.extract_strided_slice %68 {offsets = [0, 0], sizes = [8, 32], strides = [1, 1]} : vector<8x128xf32> to vector<8x32xf32>
    %cst_35 = arith.constant 5.000000e-01 : f32
    %70 = vector.broadcast %cst_35 : f32 to vector<8x32xf32>
    %71 = arith.mulf %70, %69 : vector<8x32xf32>
    %cst_36 = arith.constant 5.000000e-01 : f32
    %72 = vector.broadcast %cst_36 : f32 to vector<8x32xf32>
    %73 = arith.addf %71, %72 : vector<8x32xf32>
    %74 = vector.extract_strided_slice %68 {offsets = [0, 32], sizes = [8, 32], strides = [1, 1]} : vector<8x128xf32> to vector<8x32xf32>
    %cst_37 = arith.constant 5.000000e-01 : f32
    %75 = vector.broadcast %cst_37 : f32 to vector<8x32xf32>
    %76 = arith.mulf %75, %74 : vector<8x32xf32>
    %cst_38 = arith.constant 5.000000e-01 : f32
    %77 = vector.broadcast %cst_38 : f32 to vector<8x32xf32>
    %78 = arith.addf %76, %77 : vector<8x32xf32>
    %79 = vector.extract_strided_slice %68 {offsets = [0, 64], sizes = [8, 32], strides = [1, 1]} : vector<8x128xf32> to vector<8x32xf32>
    %80 = vector.extract_strided_slice %68 {offsets = [0, 96], sizes = [8, 32], strides = [1, 1]} : vector<8x128xf32> to vector<8x32xf32>
    %cst_39 = arith.constant 5.000000e-01 : f32
    %81 = vector.broadcast %cst_39 : f32 to vector<8x32xf32>
    %82 = arith.mulf %81, %80 : vector<8x32xf32>
    %cst_40 = arith.constant 5.000000e-01 : f32
    %83 = vector.broadcast %cst_40 : f32 to vector<8x32xf32>
    %84 = arith.addf %82, %83 : vector<8x32xf32>
    %85 = arith.mulf %78, %61 : vector<8x32xf32>
    %86 = arith.mulf %73, %79 : vector<8x32xf32>
    %87 = arith.addf %85, %86 : vector<8x32xf32>
    %88 = math.tanh %87 : vector<8x32xf32>
    %89 = arith.mulf %84, %88 : vector<8x32xf32>
    %c0_41 = arith.constant 0 : index
    %c3 = arith.constant 3 : index
    %c0_42 = arith.constant 0 : index
    %90 = vector.load %arg8[%c0_41, %c3, %c0_42] : memref<8x8x128xf32, #tpu.memory_space<vmem>>, vector<8x1x128xf32>
    %91 = vector.shape_cast %90 : vector<8x1x128xf32> to vector<8x128xf32>
    %cst_43 = arith.constant dense<0.000000e+00> : vector<8x128xf32>
    %92 = tpu.matmul %89, %9, %cst_43 {dimension_numbers = #tpu.dot_dimension_numbers<[1], [0], [0], [1], [0, 0, 1, 1], [], []>} : vector<8x32xf32>, vector<32x128xf32>, vector<8x128xf32> -> vector<8x128xf32>
    %93 = arith.addf %92, %91 : vector<8x128xf32>
    %94 = math.tanh %93 : vector<8x128xf32>
    %95 = vector.extract_strided_slice %94 {offsets = [0, 0], sizes = [8, 32], strides = [1, 1]} : vector<8x128xf32> to vector<8x32xf32>
    %cst_44 = arith.constant 5.000000e-01 : f32
    %96 = vector.broadcast %cst_44 : f32 to vector<8x32xf32>
    %97 = arith.mulf %96, %95 : vector<8x32xf32>
    %cst_45 = arith.constant 5.000000e-01 : f32
    %98 = vector.broadcast %cst_45 : f32 to vector<8x32xf32>
    %99 = arith.addf %97, %98 : vector<8x32xf32>
    %100 = vector.extract_strided_slice %94 {offsets = [0, 32], sizes = [8, 32], strides = [1, 1]} : vector<8x128xf32> to vector<8x32xf32>
    %cst_46 = arith.constant 5.000000e-01 : f32
    %101 = vector.broadcast %cst_46 : f32 to vector<8x32xf32>
    %102 = arith.mulf %101, %100 : vector<8x32xf32>
    %cst_47 = arith.constant 5.000000e-01 : f32
    %103 = vector.broadcast %cst_47 : f32 to vector<8x32xf32>
    %104 = arith.addf %102, %103 : vector<8x32xf32>
    %105 = vector.extract_strided_slice %94 {offsets = [0, 64], sizes = [8, 32], strides = [1, 1]} : vector<8x128xf32> to vector<8x32xf32>
    %106 = vector.extract_strided_slice %94 {offsets = [0, 96], sizes = [8, 32], strides = [1, 1]} : vector<8x128xf32> to vector<8x32xf32>
    %cst_48 = arith.constant 5.000000e-01 : f32
    %107 = vector.broadcast %cst_48 : f32 to vector<8x32xf32>
    %108 = arith.mulf %107, %106 : vector<8x32xf32>
    %cst_49 = arith.constant 5.000000e-01 : f32
    %109 = vector.broadcast %cst_49 : f32 to vector<8x32xf32>
    %110 = arith.addf %108, %109 : vector<8x32xf32>
    %111 = arith.mulf %104, %87 : vector<8x32xf32>
    %112 = arith.mulf %99, %105 : vector<8x32xf32>
    %113 = arith.addf %111, %112 : vector<8x32xf32>
    %114 = math.tanh %113 : vector<8x32xf32>
    %115 = arith.mulf %110, %114 : vector<8x32xf32>
    %c0_50 = arith.constant 0 : index
    %c4 = arith.constant 4 : index
    %c0_51 = arith.constant 0 : index
    %116 = vector.load %arg8[%c0_50, %c4, %c0_51] : memref<8x8x128xf32, #tpu.memory_space<vmem>>, vector<8x1x128xf32>
    %117 = vector.shape_cast %116 : vector<8x1x128xf32> to vector<8x128xf32>
    %cst_52 = arith.constant dense<0.000000e+00> : vector<8x128xf32>
    %118 = tpu.matmul %115, %9, %cst_52 {dimension_numbers = #tpu.dot_dimension_numbers<[1], [0], [0], [1], [0, 0, 1, 1], [], []>} : vector<8x32xf32>, vector<32x128xf32>, vector<8x128xf32> -> vector<8x128xf32>
    %119 = arith.addf %118, %117 : vector<8x128xf32>
    %120 = math.tanh %119 : vector<8x128xf32>
    %121 = vector.extract_strided_slice %120 {offsets = [0, 0], sizes = [8, 32], strides = [1, 1]} : vector<8x128xf32> to vector<8x32xf32>
    %cst_53 = arith.constant 5.000000e-01 : f32
    %122 = vector.broadcast %cst_53 : f32 to vector<8x32xf32>
    %123 = arith.mulf %122, %121 : vector<8x32xf32>
    %cst_54 = arith.constant 5.000000e-01 : f32
    %124 = vector.broadcast %cst_54 : f32 to vector<8x32xf32>
    %125 = arith.addf %123, %124 : vector<8x32xf32>
    %126 = vector.extract_strided_slice %120 {offsets = [0, 32], sizes = [8, 32], strides = [1, 1]} : vector<8x128xf32> to vector<8x32xf32>
    %cst_55 = arith.constant 5.000000e-01 : f32
    %127 = vector.broadcast %cst_55 : f32 to vector<8x32xf32>
    %128 = arith.mulf %127, %126 : vector<8x32xf32>
    %cst_56 = arith.constant 5.000000e-01 : f32
    %129 = vector.broadcast %cst_56 : f32 to vector<8x32xf32>
    %130 = arith.addf %128, %129 : vector<8x32xf32>
    %131 = vector.extract_strided_slice %120 {offsets = [0, 64], sizes = [8, 32], strides = [1, 1]} : vector<8x128xf32> to vector<8x32xf32>
    %132 = vector.extract_strided_slice %120 {offsets = [0, 96], sizes = [8, 32], strides = [1, 1]} : vector<8x128xf32> to vector<8x32xf32>
    %cst_57 = arith.constant 5.000000e-01 : f32
    %133 = vector.broadcast %cst_57 : f32 to vector<8x32xf32>
    %134 = arith.mulf %133, %132 : vector<8x32xf32>
    %cst_58 = arith.constant 5.000000e-01 : f32
    %135 = vector.broadcast %cst_58 : f32 to vector<8x32xf32>
    %136 = arith.addf %134, %135 : vector<8x32xf32>
    %137 = arith.mulf %130, %113 : vector<8x32xf32>
    %138 = arith.mulf %125, %131 : vector<8x32xf32>
    %139 = arith.addf %137, %138 : vector<8x32xf32>
    %140 = math.tanh %139 : vector<8x32xf32>
    %141 = arith.mulf %136, %140 : vector<8x32xf32>
    %c0_59 = arith.constant 0 : index
    %c5 = arith.constant 5 : index
    %c0_60 = arith.constant 0 : index
    %142 = vector.load %arg8[%c0_59, %c5, %c0_60] : memref<8x8x128xf32, #tpu.memory_space<vmem>>, vector<8x1x128xf32>
    %143 = vector.shape_cast %142 : vector<8x1x128xf32> to vector<8x128xf32>
    %cst_61 = arith.constant dense<0.000000e+00> : vector<8x128xf32>
    %144 = tpu.matmul %141, %9, %cst_61 {dimension_numbers = #tpu.dot_dimension_numbers<[1], [0], [0], [1], [0, 0, 1, 1], [], []>} : vector<8x32xf32>, vector<32x128xf32>, vector<8x128xf32> -> vector<8x128xf32>
    %145 = arith.addf %144, %143 : vector<8x128xf32>
    %146 = math.tanh %145 : vector<8x128xf32>
    %147 = vector.extract_strided_slice %146 {offsets = [0, 0], sizes = [8, 32], strides = [1, 1]} : vector<8x128xf32> to vector<8x32xf32>
    %cst_62 = arith.constant 5.000000e-01 : f32
    %148 = vector.broadcast %cst_62 : f32 to vector<8x32xf32>
    %149 = arith.mulf %148, %147 : vector<8x32xf32>
    %cst_63 = arith.constant 5.000000e-01 : f32
    %150 = vector.broadcast %cst_63 : f32 to vector<8x32xf32>
    %151 = arith.addf %149, %150 : vector<8x32xf32>
    %152 = vector.extract_strided_slice %146 {offsets = [0, 32], sizes = [8, 32], strides = [1, 1]} : vector<8x128xf32> to vector<8x32xf32>
    %cst_64 = arith.constant 5.000000e-01 : f32
    %153 = vector.broadcast %cst_64 : f32 to vector<8x32xf32>
    %154 = arith.mulf %153, %152 : vector<8x32xf32>
    %cst_65 = arith.constant 5.000000e-01 : f32
    %155 = vector.broadcast %cst_65 : f32 to vector<8x32xf32>
    %156 = arith.addf %154, %155 : vector<8x32xf32>
    %157 = vector.extract_strided_slice %146 {offsets = [0, 64], sizes = [8, 32], strides = [1, 1]} : vector<8x128xf32> to vector<8x32xf32>
    %158 = vector.extract_strided_slice %146 {offsets = [0, 96], sizes = [8, 32], strides = [1, 1]} : vector<8x128xf32> to vector<8x32xf32>
    %cst_66 = arith.constant 5.000000e-01 : f32
    %159 = vector.broadcast %cst_66 : f32 to vector<8x32xf32>
    %160 = arith.mulf %159, %158 : vector<8x32xf32>
    %cst_67 = arith.constant 5.000000e-01 : f32
    %161 = vector.broadcast %cst_67 : f32 to vector<8x32xf32>
    %162 = arith.addf %160, %161 : vector<8x32xf32>
    %163 = arith.mulf %156, %139 : vector<8x32xf32>
    %164 = arith.mulf %151, %157 : vector<8x32xf32>
    %165 = arith.addf %163, %164 : vector<8x32xf32>
    %166 = math.tanh %165 : vector<8x32xf32>
    %167 = arith.mulf %162, %166 : vector<8x32xf32>
    %c0_68 = arith.constant 0 : index
    %c6 = arith.constant 6 : index
    %c0_69 = arith.constant 0 : index
    %168 = vector.load %arg8[%c0_68, %c6, %c0_69] : memref<8x8x128xf32, #tpu.memory_space<vmem>>, vector<8x1x128xf32>
    %169 = vector.shape_cast %168 : vector<8x1x128xf32> to vector<8x128xf32>
    %cst_70 = arith.constant dense<0.000000e+00> : vector<8x128xf32>
    %170 = tpu.matmul %167, %9, %cst_70 {dimension_numbers = #tpu.dot_dimension_numbers<[1], [0], [0], [1], [0, 0, 1, 1], [], []>} : vector<8x32xf32>, vector<32x128xf32>, vector<8x128xf32> -> vector<8x128xf32>
    %171 = arith.addf %170, %169 : vector<8x128xf32>
    %172 = math.tanh %171 : vector<8x128xf32>
    %173 = vector.extract_strided_slice %172 {offsets = [0, 0], sizes = [8, 32], strides = [1, 1]} : vector<8x128xf32> to vector<8x32xf32>
    %cst_71 = arith.constant 5.000000e-01 : f32
    %174 = vector.broadcast %cst_71 : f32 to vector<8x32xf32>
    %175 = arith.mulf %174, %173 : vector<8x32xf32>
    %cst_72 = arith.constant 5.000000e-01 : f32
    %176 = vector.broadcast %cst_72 : f32 to vector<8x32xf32>
    %177 = arith.addf %175, %176 : vector<8x32xf32>
    %178 = vector.extract_strided_slice %172 {offsets = [0, 32], sizes = [8, 32], strides = [1, 1]} : vector<8x128xf32> to vector<8x32xf32>
    %cst_73 = arith.constant 5.000000e-01 : f32
    %179 = vector.broadcast %cst_73 : f32 to vector<8x32xf32>
    %180 = arith.mulf %179, %178 : vector<8x32xf32>
    %cst_74 = arith.constant 5.000000e-01 : f32
    %181 = vector.broadcast %cst_74 : f32 to vector<8x32xf32>
    %182 = arith.addf %180, %181 : vector<8x32xf32>
    %183 = vector.extract_strided_slice %172 {offsets = [0, 64], sizes = [8, 32], strides = [1, 1]} : vector<8x128xf32> to vector<8x32xf32>
    %184 = vector.extract_strided_slice %172 {offsets = [0, 96], sizes = [8, 32], strides = [1, 1]} : vector<8x128xf32> to vector<8x32xf32>
    %cst_75 = arith.constant 5.000000e-01 : f32
    %185 = vector.broadcast %cst_75 : f32 to vector<8x32xf32>
    %186 = arith.mulf %185, %184 : vector<8x32xf32>
    %cst_76 = arith.constant 5.000000e-01 : f32
    %187 = vector.broadcast %cst_76 : f32 to vector<8x32xf32>
    %188 = arith.addf %186, %187 : vector<8x32xf32>
    %189 = arith.mulf %182, %165 : vector<8x32xf32>
    %190 = arith.mulf %177, %183 : vector<8x32xf32>
    %191 = arith.addf %189, %190 : vector<8x32xf32>
    %192 = math.tanh %191 : vector<8x32xf32>
    %193 = arith.mulf %188, %192 : vector<8x32xf32>
    %c0_77 = arith.constant 0 : index
    %c7 = arith.constant 7 : index
    %c0_78 = arith.constant 0 : index
    %194 = vector.load %arg8[%c0_77, %c7, %c0_78] : memref<8x8x128xf32, #tpu.memory_space<vmem>>, vector<8x1x128xf32>
    %195 = vector.shape_cast %194 : vector<8x1x128xf32> to vector<8x128xf32>
    %cst_79 = arith.constant dense<0.000000e+00> : vector<8x128xf32>
    %196 = tpu.matmul %193, %9, %cst_79 {dimension_numbers = #tpu.dot_dimension_numbers<[1], [0], [0], [1], [0, 0, 1, 1], [], []>} : vector<8x32xf32>, vector<32x128xf32>, vector<8x128xf32> -> vector<8x128xf32>
    %197 = arith.addf %196, %195 : vector<8x128xf32>
    %198 = math.tanh %197 : vector<8x128xf32>
    %199 = vector.extract_strided_slice %198 {offsets = [0, 0], sizes = [8, 32], strides = [1, 1]} : vector<8x128xf32> to vector<8x32xf32>
    %cst_80 = arith.constant 5.000000e-01 : f32
    %200 = vector.broadcast %cst_80 : f32 to vector<8x32xf32>
    %201 = arith.mulf %200, %199 : vector<8x32xf32>
    %cst_81 = arith.constant 5.000000e-01 : f32
    %202 = vector.broadcast %cst_81 : f32 to vector<8x32xf32>
    %203 = arith.addf %201, %202 : vector<8x32xf32>
    %204 = vector.extract_strided_slice %198 {offsets = [0, 32], sizes = [8, 32], strides = [1, 1]} : vector<8x128xf32> to vector<8x32xf32>
    %cst_82 = arith.constant 5.000000e-01 : f32
    %205 = vector.broadcast %cst_82 : f32 to vector<8x32xf32>
    %206 = arith.mulf %205, %204 : vector<8x32xf32>
    %cst_83 = arith.constant 5.000000e-01 : f32
    %207 = vector.broadcast %cst_83 : f32 to vector<8x32xf32>
    %208 = arith.addf %206, %207 : vector<8x32xf32>
    %209 = vector.extract_strided_slice %198 {offsets = [0, 64], sizes = [8, 32], strides = [1, 1]} : vector<8x128xf32> to vector<8x32xf32>
    %210 = vector.extract_strided_slice %198 {offsets = [0, 96], sizes = [8, 32], strides = [1, 1]} : vector<8x128xf32> to vector<8x32xf32>
    %cst_84 = arith.constant 5.000000e-01 : f32
    %211 = vector.broadcast %cst_84 : f32 to vector<8x32xf32>
    %212 = arith.mulf %211, %210 : vector<8x32xf32>
    %cst_85 = arith.constant 5.000000e-01 : f32
    %213 = vector.broadcast %cst_85 : f32 to vector<8x32xf32>
    %214 = arith.addf %212, %213 : vector<8x32xf32>
    %215 = arith.mulf %208, %191 : vector<8x32xf32>
    %216 = arith.mulf %203, %209 : vector<8x32xf32>
    %217 = arith.addf %215, %216 : vector<8x32xf32>
    %218 = math.tanh %217 : vector<8x32xf32>
    %219 = arith.mulf %214, %218 : vector<8x32xf32>
    %220 = tpu.transpose %219, [1, 0] : vector<8x32xf32> -> vector<32x8xf32>
    %c0_86 = arith.constant 0 : index
    %c0_87 = arith.constant 0 : index
    %221 = vector.load %arg5[%c0_86, %c0_87] : memref<1x32xf32, #tpu.memory_space<vmem>>, vector<1x32xf32>
    %cst_88 = arith.constant dense<0.000000e+00> : vector<1x8xf32>
    %222 = tpu.matmul %221, %220, %cst_88 {dimension_numbers = #tpu.dot_dimension_numbers<[1], [0], [0], [1], [0, 0, 1, 1], [], []>} : vector<1x32xf32>, vector<32x8xf32>, vector<1x8xf32> -> vector<1x8xf32>
    %c0_89 = arith.constant 0 : index
    %223 = memref.load %arg6[%c0_89] : memref<1xf32, #tpu.memory_space<smem>>
    %224 = vector.broadcast %223 : f32 to vector<1x8xf32>
    %225 = arith.addf %222, %224 : vector<1x8xf32>
    %226 = vector.shape_cast %225 : vector<1x8xf32> to vector<1x1x8xf32>
    %c0_90 = arith.constant 0 : index
    %c0_91 = arith.constant 0 : index
    %c0_92 = arith.constant 0 : index
    %227 = vector.load %arg7[%c0_90, %c0_91, %c0_92] : memref<1x1x8xf32, #tpu.memory_space<vmem>>, vector<1x1x8xf32>
    tpu.vector_store %arg7[%c0_90, %c0_91, %c0_92], %226 {strides = array<i32>} : memref<1x1x8xf32, #tpu.memory_space<vmem>>, vector<1x1x8xf32>,
    return
  }
  func.func @transform_0(%arg0: i32) -> (i32, i32, i32) {
    %c0_i32 = arith.constant 0 : i32
    %c0_i32_0 = arith.constant 0 : i32
    %c0_i32_1 = arith.constant 0 : i32
    return %arg0, %c0_i32, %c0_i32_0 : i32, i32, i32
  }
  func.func @transform_1(%arg0: i32) -> (i32, i32) {
    %c0_i32 = arith.constant 0 : i32
    %c0_i32_0 = arith.constant 0 : i32
    %c0_i32_1 = arith.constant 0 : i32
    return %c0_i32, %c0_i32_0 : i32, i32
  }
  func.func @transform_2(%arg0: i32) -> (i32, i32) {
    %c0_i32 = arith.constant 0 : i32
    %c0_i32_0 = arith.constant 0 : i32
    %c0_i32_1 = arith.constant 0 : i32
    return %c0_i32, %c0_i32_0 : i32, i32
  }
  func.func @transform_3(%arg0: i32) -> (i32, i32) {
    %c0_i32 = arith.constant 0 : i32
    %c0_i32_0 = arith.constant 0 : i32
    %c0_i32_1 = arith.constant 0 : i32
    return %c0_i32, %c0_i32_0 : i32, i32
  }
  func.func @transform_4(%arg0: i32) -> (i32, i32) {
    %c0_i32 = arith.constant 0 : i32
    %c0_i32_0 = arith.constant 0 : i32
    %c0_i32_1 = arith.constant 0 : i32
    return %c0_i32, %c0_i32_0 : i32, i32
  }
  func.func @transform_5(%arg0: i32) -> i32 {
    %c0_i32 = arith.constant 0 : i32
    %c0_i32_0 = arith.constant 0 : i32
    return %c0_i32 : i32
  }
  func.func @transform_6(%arg0: i32) -> (i32, i32, i32) {
    %c0_i32 = arith.constant 0 : i32
    %c0_i32_0 = arith.constant 0 : i32
    %c0_i32_1 = arith.constant 0 : i32
    return %arg0, %c0_i32, %c0_i32_0 : i32, i32, i32
  }
}

</mosaic_0001>

<llo_original>
// kernel: tpu_custom_call.1
$region0: #{tpu_custom_call.1}
  #allocation0 [shape = 'u32[]', space=smem, size = 0x4, offset = 0x4, fixed_abs, tag = 'smem constant byte address 0x4 - core index']
  #allocation1 [shape = 'u32[144,128]{1,0:T(1,128)}', space=vmem, size = 0x12000, scoped, tag = 'internal scratch']
  #allocation2 [shape = 'f32[8,8,128]{2,1,0:T(8,128)}', space=vmem, size = 0x8000, scoped, tag = 'scratch operand']
  #allocation3 [shape = 'f32[1]{0:T(128)S(6)}', space=smem, size = 0x200, scoped, tag = 'scoped memory for tpu_custom_call.1']
  %s0 = inlined_call_operand.vmem [shape: f32[8,8,4], index: 0, kind: input, shape index: {}]
  %s1 = inlined_call_operand.vmem [shape: f32[4,128], index: 1, kind: input, shape index: {}]
  %s2 = inlined_call_operand.vmem [shape: f32[32,128], index: 2, kind: input, shape index: {}]
  %s3 = inlined_call_operand.vmem [shape: f32[1,128], index: 3, kind: input, shape index: {}]
  %s4 = inlined_call_operand.vmem [shape: f32[1,32], index: 4, kind: input, shape index: {}]
  %s5 = inlined_call_operand.<no memory space> [shape: f32[1], index: 5, kind: input, shape index: {}]
  %s6 = inlined_call_operand.hbm [shape: f32[1,1,8], index: 6, kind: output, shape index: {}]
  %s7 = sld [smem:[#allocation0]]
  $region34: #{tpu_custom_call.1} parent=0
    _
  %s9 = ssub.s32 1, %s7
  %s10 = scalar_select 0, %s9, %s7
  %11 = sst [smem:[#allocation3]] %s5
  $region1: #{tpu_custom_call.1} parent=0
    #allocation4 [shape = 'u8[512]{0}', space=vmem, size = 0x400, scoped, tag = 'output window, operand 0, single buffered']
    #allocation5 [shape = 's32[1]{0}', space=sflag, size = 0x4, scoped, tag = 'scoped memory for tpu_custom_call.1']
    %12 = vsyncpa [#allocation5], 0
    // Predicated region
    $region2: #{tpu_custom_call.1} parent=1 // pred_check
      _
    $region3: #{tpu_custom_call.1} parent=1 // pred_check_branch
      %14 = sbr.rel (0) target = $region5
    $region4: #{tpu_custom_call.1} parent=1 // pred_region
      _
    $region5: #{tpu_custom_call.1} parent=1 // pred_fallthru
      _
    // Predicated region
    $region6: #{tpu_custom_call.1} parent=1 // pred_check
      _
    $region7: #{tpu_custom_call.1} parent=1 // pred_check_branch
      %16 = sbr.rel (0) target = $region9
    $region8: #{tpu_custom_call.1} parent=1 // pred_region
      _
    $region9: #{tpu_custom_call.1} parent=1 // pred_fallthru
      _
    // Predicated region
    $region10: #{tpu_custom_call.1} parent=1 // pred_check
      _
    $region11: #{tpu_custom_call.1} parent=1 // pred_check_branch
      %18 = sbr.rel (0) target = $region13
    $region12: #{tpu_custom_call.1} parent=1 // pred_region
      _
    $region13: #{tpu_custom_call.1} parent=1 // pred_fallthru
      _
    // Predicated region
    $region14: #{tpu_custom_call.1} parent=1 // pred_check
      _
    $region15: #{tpu_custom_call.1} parent=1 // pred_check_branch
      %20 = sbr.rel (0) target = $region17
    $region16: #{tpu_custom_call.1} parent=1 // pred_region
      _
    $region17: #{tpu_custom_call.1} parent=1 // pred_fallthru
      _
    // Predicated region
    $region18: #{tpu_custom_call.1} parent=1 // pred_check
      _
    $region19: #{tpu_custom_call.1} parent=1 // pred_check_branch
      %22 = sbr.rel (0) target = $region21
    $region20: #{tpu_custom_call.1} parent=1 // pred_region
      _
    $region21: #{tpu_custom_call.1} parent=1 // pred_fallthru
      _
    // Predicated region
    $region22: #{tpu_custom_call.1} parent=1 // pred_check
      _
    $region23: #{tpu_custom_call.1} parent=1 // pred_check_branch
      %24 = sbr.rel (0) target = $region25
    $region24: #{tpu_custom_call.1} parent=1 // pred_region
      _
    $region25: #{tpu_custom_call.1} parent=1 // pred_fallthru
      _
    %v25 = vld [vmem:[%s0] sm:$0xff]
    %v26 = vld [vmem:[%s0 + $0x8] sm:$0xff]
    %v27 = vld [vmem:[%s0 + $0x10] sm:$0xff]
    %v28 = vld [vmem:[%s0 + $0x18] sm:$0xff]
    %v29 = vld [vmem:[%s0 + $0x20] sm:$0xff]
    %v30 = vld [vmem:[%s0 + $0x28] sm:$0xff]
    %v31 = vld [vmem:[%s0 + $0x30] sm:$0xff]
    %v32 = vld [vmem:[%s0 + $0x38] sm:$0xff]
    %v33 = vld [vmem:[%s1] sm:$0xf]
    %v34 = vld [vmem:[%s3] sm:$0x1]
    %v36 = vlaneseq
    %v37 = vshrl.u32 %v36, 7
    %v38 = vsub.s32 0, %v37
    %v39 = vrot.slane %v34, %v38
    %vm41 = vcmask 31744
    %v43 = vsel %vm41, %v25, 0
    %v46 = vsel %vm41, %v26, 0
    %v49 = vsel %vm41, %v27, 0
    %v52 = vsel %vm41, %v28, 0
    %v55 = vsel %vm41, %v29, 0
    %v58 = vsel %vm41, %v30, 0
    %v61 = vsel %vm41, %v31, 0
    %v64 = vsel %vm41, %v32, 0
    %vm66 = vcmask 1043456
    %v68 = vsel %vm66, %v33, 0
    %70 = vmatprep.subr.mxu0 0.0
    %71 = vmatpush1.msra.mxu0 %v68
    %72 = vmatprep.subr.mxu0 0.0
    %73 = vmatpush1.msra.mxu0 0.0
    %74 = vmatprep.subr.mxu0 0.0
    %75 = vmatpush1.msra.mxu0 0.0
    %76 = vmatprep.subr.mxu0 0.0
    %77 = vmatpush1.msra.mxu0 0.0
    %78 = vmatprep.subr.mxu0 0.0
    %79 = vmatpush1.msra.mxu0 0.0
    %80 = vmatprep.subr.mxu0 0.0
    %81 = vmatpush1.msra.mxu0 0.0
    %82 = vmatprep.subr.mxu0 0.0
    %83 = vmatpush1.msra.mxu0 0.0
    %84 = vmatprep.subr.mxu0 0.0
    %85 = vmatpush1.msra.mxu0 0.0
    %86 = vmatprep.subr.mxu0 0.0
    %87 = vmatpush1.msra.mxu0 0.0
    %88 = vmatprep.subr.mxu0 0.0
    %89 = vmatpush1.msra.mxu0 0.0
    %90 = vmatprep.subr.mxu0 0.0
    %91 = vmatpush1.msra.mxu0 0.0
    %92 = vmatprep.subr.mxu0 0.0
    %93 = vmatpush1.msra.mxu0 0.0
    %94 = vmatprep.subr.mxu0 0.0
    %95 = vmatpush1.msra.mxu0 0.0
    %96 = vmatprep.subr.mxu0 0.0
    %97 = vmatpush1.msra.mxu0 0.0
    %98 = vmatprep.subr.mxu0 0.0
    %99 = vmatpush1.msra.mxu0 0.0
    %100 = vmatprep.subr.mxu0 0.0
    %101 = vmatpush1.msra.mxu0 0.0
    %102 = vmatprep.subr.mxu0 0.0
    %103 = vmatpush1.msra.mxu0 0.0
    %104 = vmatprep.subr.mxu0 0.0
    %105 = vmatpush1.msra.mxu0 0.0
    %106 = vmatprep.subr.mxu0 0.0
    %107 = vmatpush1.msra.mxu0 0.0
    %108 = vmatprep.subr.mxu0 0.0
    %109 = vmatpush1.msra.mxu0 0.0
    %110 = vmatprep.subr.mxu0 0.0
    %111 = vmatpush1.msra.mxu0 0.0
    %112 = vmatprep.subr.mxu0 0.0
    %113 = vmatpush1.msra.mxu0 0.0
    %114 = vmatprep.subr.mxu0 0.0
    %115 = vmatpush1.msra.mxu0 0.0
    %116 = vmatprep.subr.mxu0 0.0
    %117 = vmatpush1.msra.mxu0 0.0
    %118 = vmatprep.subr.mxu0 0.0
    %119 = vmatpush1.msra.mxu0 0.0
    %120 = vmatprep.subr.mxu0 0.0
    %121 = vmatpush1.msra.mxu0 0.0
    %122 = vmatprep.subr.mxu0 0.0
    %123 = vmatpush1.msra.mxu0 0.0
    %124 = vmatprep.subr.mxu0 0.0
    %125 = vmatpush1.msra.mxu0 0.0
    %126 = vmatprep.subr.mxu0 0.0
    %127 = vmatpush1.msra.mxu0 0.0
    %128 = vmatprep.subr.mxu0 0.0
    %129 = vmatpush1.msra.mxu0 0.0
    %130 = vmatprep.subr.mxu0 0.0
    %131 = vmatpush1.msra.mxu0 0.0
    %132 = vmatprep.subr.mxu0 0.0
    %133 = vmatpush1.msra.mxu0 0.0
    %134 = vmatprep.mubr.f32.mxu0 0.0
    %135 = vmatmul.mubr.f32.gmra.mrb[0].mxu0 %v43
    %v136 = vpop.f32.mrb[0].mxu0
    %v137 = vadd.f32 %v39, %v136
    %v138 = vpop.f32.mrb[0].mxu0
    %139 = vmatprep.mubr.f32.mxu0 0.0
    %140 = vmatmul.mubr.f32.gmra.mrb[0].mxu0 %v46
    %v141 = vpop.f32.mrb[0].mxu0
    %v142 = vadd.f32 %v39, %v141
    %v143 = vpop.f32.mrb[0].mxu0
    %144 = vmatprep.mubr.f32.mxu0 0.0
    %145 = vmatmul.mubr.f32.gmra.mrb[0].mxu0 %v49
    %v146 = vpop.f32.mrb[0].mxu0
    %v147 = vadd.f32 %v39, %v146
    %v148 = vpop.f32.mrb[0].mxu0
    %149 = vmatprep.mubr.f32.mxu0 0.0
    %150 = vmatmul.mubr.f32.gmra.mrb[0].mxu0 %v52
    %v151 = vpop.f32.mrb[0].mxu0
    %v152 = vadd.f32 %v39, %v151
    %v153 = vpop.f32.mrb[0].mxu0
    %154 = vmatprep.mubr.f32.mxu0 0.0
    %155 = vmatmul.mubr.f32.gmra.mrb[0].mxu0 %v55
    %v156 = vpop.f32.mrb[0].mxu0
    %v157 = vadd.f32 %v39, %v156
    %v158 = vpop.f32.mrb[0].mxu0
    %159 = vmatprep.mubr.f32.mxu0 0.0
    %160 = vmatmul.mubr.f32.gmra.mrb[0].mxu0 %v58
    %v161 = vpop.f32.mrb[0].mxu0
    %v162 = vadd.f32 %v39, %v161
    %v163 = vpop.f32.mrb[0].mxu0
    %164 = vmatprep.mubr.f32.mxu0 0.0
    %165 = vmatmul.mubr.f32.gmra.mrb[0].mxu0 %v61
    %v166 = vpop.f32.mrb[0].mxu0
    %v167 = vadd.f32 %v39, %v166
    %v168 = vpop.f32.mrb[0].mxu0
    %169 = vmatprep.mubr.f32.mxu0 0.0
    %170 = vmatmul.mubr.f32.gmra.mrb[0].mxu0 %v64
    %v171 = vpop.f32.mrb[0].mxu0
    %v172 = vadd.f32 %v39, %v171
    %v173 = vpop.f32.mrb[0].mxu0
    %174 = vdwg.mxu0
    %175 = vst [vmem:[#allocation2] sm:$0xff] %v137
    %176 = vst [vmem:[#allocation2 + $0x8] sm:$0xff] %v142
    %177 = vst [vmem:[#allocation2 + $0x10] sm:$0xff] %v147
    %178 = vst [vmem:[#allocation2 + $0x18] sm:$0xff] %v152
    %179 = vst [vmem:[#allocation2 + $0x20] sm:$0xff] %v157
    %180 = vst [vmem:[#allocation2 + $0x28] sm:$0xff] %v162
    %181 = vst [vmem:[#allocation2 + $0x30] sm:$0xff] %v167
    %182 = vst [vmem:[#allocation2 + $0x38] sm:$0xff] %v172
    %v183 = vld [vmem:[%s2] sm:$0xff]
    %v184 = vld [vmem:[%s2 + $0x8] sm:$0xff]
    %v185 = vld [vmem:[%s2 + $0x10] sm:$0xff]
    %v186 = vld [vmem:[%s2 + $0x18] sm:$0xff]
    %v187 = vld [vmem:[#allocation2] sm:$0x1]
    %v188 = vld [vmem:[#allocation2 + $0x8] sm:$0x1]
    %v189 = vld [vmem:[#allocation2 + $0x10] sm:$0x1]
    %v190 = vld [vmem:[#allocation2 + $0x18] sm:$0x1]
    %v191 = vld [vmem:[#allocation2 + $0x20] sm:$0x1]
    %v192 = vld [vmem:[#allocation2 + $0x28] sm:$0x1]
    %v193 = vld [vmem:[#allocation2 + $0x30] sm:$0x1]
    %v194 = vld [vmem:[#allocation2 + $0x38] sm:$0x1]
    %v203 = vrot.slane %v188, 7
    %vm204 = vcmask 1041409
    %v205 = vsel %vm204, %v203, %v187
    %v206 = vrot.slane %v189, 6
    %vm207 = vcmask 1042434
    %v208 = vsel %vm207, %v206, %v205
    %v209 = vrot.slane %v190, 5
    %vm210 = vcmask 1043459
    %v211 = vsel %vm210, %v209, %v208
    %v212 = vrot.slane %v191, 4
    %vm213 = vcmask 1044484
    %v214 = vsel %vm213, %v212, %v211
    %v215 = vrot.slane %v192, 3
    %vm216 = vcmask 1045509
    %v217 = vsel %vm216, %v215, %v214
    %v218 = vrot.slane %v193, 2
    %vm219 = vcmask 1046534
    %v220 = vsel %vm219, %v218, %v217
    %v221 = vrot.slane %v194, 1
    %vm222 = vcmask 1047559
    %v223 = vsel %vm222, %v221, %v220
    %vm225 = vcmask 261120
    %v227 = vsel %vm225, 0.0, 0
    %229 = vmatprep.subr.mxu0 0.0
    %230 = vmatpush1.msra.mxu0 %v183
    %231 = vmatprep.subr.mxu0 0.0
    %232 = vmatpush1.msra.mxu0 %v184
    %233 = vmatprep.subr.mxu0 0.0
    %234 = vmatpush1.msra.mxu0 %v185
    %235 = vmatprep.subr.mxu0 0.0
    %236 = vmatpush1.msra.mxu0 %v186
    %237 = vmatprep.subr.mxu0 0.0
    %238 = vmatpush1.msra.mxu0 0.0
    %239 = vmatprep.subr.mxu0 0.0
    %240 = vmatpush1.msra.mxu0 0.0
    %241 = vmatprep.subr.mxu0 0.0
    %242 = vmatpush1.msra.mxu0 0.0
    %243 = vmatprep.subr.mxu0 0.0
    %244 = vmatpush1.msra.mxu0 0.0
    %245 = vmatprep.subr.mxu0 0.0
    %246 = vmatpush1.msra.mxu0 0.0
    %247 = vmatprep.subr.mxu0 0.0
    %248 = vmatpush1.msra.mxu0 0.0
    %249 = vmatprep.subr.mxu0 0.0
    %250 = vmatpush1.msra.mxu0 0.0
    %251 = vmatprep.subr.mxu0 0.0
    %252 = vmatpush1.msra.mxu0 0.0
    %253 = vmatprep.subr.mxu0 0.0
    %254 = vmatpush1.msra.mxu0 0.0
    %255 = vmatprep.subr.mxu0 0.0
    %256 = vmatpush1.msra.mxu0 0.0
    %257 = vmatprep.subr.mxu0 0.0
    %258 = vmatpush1.msra.mxu0 0.0
    %259 = vmatprep.subr.mxu0 0.0
    %260 = vmatpush1.msra.mxu0 0.0
    %261 = vmatprep.subr.mxu0 0.0
    %262 = vmatpush1.msra.mxu0 0.0
    %263 = vmatprep.subr.mxu0 0.0
    %264 = vmatpush1.msra.mxu0 0.0
    %265 = vmatprep.subr.mxu0 0.0
    %266 = vmatpush1.msra.mxu0 0.0
    %267 = vmatprep.subr.mxu0 0.0
    %268 = vmatpush1.msra.mxu0 0.0
    %269 = vmatprep.subr.mxu0 0.0
    %270 = vmatpush1.msra.mxu0 0.0
    %271 = vmatprep.subr.mxu0 0.0
    %272 = vmatpush1.msra.mxu0 0.0
    %273 = vmatprep.subr.mxu0 0.0
    %274 = vmatpush1.msra.mxu0 0.0
    %275 = vmatprep.subr.mxu0 0.0
    %276 = vmatpush1.msra.mxu0 0.0
    %277 = vmatprep.subr.mxu0 0.0
    %278 = vmatpush1.msra.mxu0 0.0
    %279 = vmatprep.subr.mxu0 0.0
    %280 = vmatpush1.msra.mxu0 0.0
    %281 = vmatprep.subr.mxu0 0.0
    %282 = vmatpush1.msra.mxu0 0.0
    %283 = vmatprep.subr.mxu0 0.0
    %284 = vmatpush1.msra.mxu0 0.0
    %285 = vmatprep.subr.mxu0 0.0
    %286 = vmatpush1.msra.mxu0 0.0
    %287 = vmatprep.subr.mxu0 0.0
    %288 = vmatpush1.msra.mxu0 0.0
    %289 = vmatprep.subr.mxu0 0.0
    %290 = vmatpush1.msra.mxu0 0.0
    %291 = vmatprep.subr.mxu0 0.0
    %292 = vmatpush1.msra.mxu0 0.0
    %293 = vmatprep.mubr.f32.mxu0 0.0
    %294 = vmatmul.mubr.f32.gmra.mrb[0].mxu0 %v227
    %v295 = vpop.f32.mrb[0].mxu0
    %v296 = vadd.f32 %v223, %v295
    %v297 = vpop.f32.mrb[0].mxu0
    %298 = vdwg.mxu0
    %v299 = vtanh.pop %v296
    %v300 = vmul.f32 %v299, 0.5
    %v301 = vadd.f32 %v300, 0.5
    %v302 = vmul.f32 %v301, 0.0
    %304 = vrot.lane.b32.xlu0 %v299, 64
    %v305 = vpop.permute.xlu0 %304
    %v307 = vmul.f32 %v301, %v305
    %309 = vrot.lane.b32.xlu0 %v307, 32
    %v310 = vpop.permute.xlu0 %309
    %v312 = vadd.f32 %v302, %v310
    %v313 = vtanh.pop %v312
    %315 = vrot.lane.b32.xlu0 %v313, 64
    %v316 = vpop.permute.xlu0 %315
    %v318 = vmul.f32 %v301, %v316
    %v319 = vld [vmem:[#allocation2 + $0x1] sm:$0x1]
    %v320 = vld [vmem:[#allocation2 + $0x9] sm:$0x1]
    %v321 = vld [vmem:[#allocation2 + $0x11] sm:$0x1]
    %v322 = vld [vmem:[#allocation2 + $0x19] sm:$0x1]
    %v323 = vld [vmem:[#allocation2 + $0x21] sm:$0x1]
    %v324 = vld [vmem:[#allocation2 + $0x29] sm:$0x1]
    %v325 = vld [vmem:[#allocation2 + $0x31] sm:$0x1]
    %v326 = vld [vmem:[#allocation2 + $0x39] sm:$0x1]
    %328 = vrot.lane.b32.xlu0 %v318, 32
    %v329 = vpop.permute.xlu0 %328
    %v338 = vrot.slane %v320, 7
    %v339 = vsel %vm204, %v338, %v319
    %v340 = vrot.slane %v321, 6
    %v341 = vsel %vm207, %v340, %v339
    %v342 = vrot.slane %v322, 5
    %v343 = vsel %vm210, %v342, %v341
    %v344 = vrot.slane %v323, 4
    %v345 = vsel %vm213, %v344, %v343
    %v346 = vrot.slane %v324, 3
    %v347 = vsel %vm216, %v346, %v345
    %v348 = vrot.slane %v325, 2
    %v349 = vsel %vm219, %v348, %v347
    %v350 = vrot.slane %v326, 1
    %v351 = vsel %vm222, %v350, %v349
    %v353 = vsel %vm225, %v329, 0
    %355 = vmatprep.subr.mxu0 0.0
    %356 = vmatpush1.msra.mxu0 %v183
    %357 = vmatprep.subr.mxu0 0.0
    %358 = vmatpush1.msra.mxu0 %v184
    %359 = vmatprep.subr.mxu0 0.0
    %360 = vmatpush1.msra.mxu0 %v185
    %361 = vmatprep.subr.mxu0 0.0
    %362 = vmatpush1.msra.mxu0 %v186
    %363 = vmatprep.subr.mxu0 0.0
    %364 = vmatpush1.msra.mxu0 0.0
    %365 = vmatprep.subr.mxu0 0.0
    %366 = vmatpush1.msra.mxu0 0.0
    %367 = vmatprep.subr.mxu0 0.0
    %368 = vmatpush1.msra.mxu0 0.0
    %369 = vmatprep.subr.mxu0 0.0
    %370 = vmatpush1.msra.mxu0 0.0
    %371 = vmatprep.subr.mxu0 0.0
    %372 = vmatpush1.msra.mxu0 0.0
    %373 = vmatprep.subr.mxu0 0.0
    %374 = vmatpush1.msra.mxu0 0.0
    %375 = vmatprep.subr.mxu0 0.0
    %376 = vmatpush1.msra.mxu0 0.0
    %377 = vmatprep.subr.mxu0 0.0
    %378 = vmatpush1.msra.mxu0 0.0
    %379 = vmatprep.subr.mxu0 0.0
    %380 = vmatpush1.msra.mxu0 0.0
    %381 = vmatprep.subr.mxu0 0.0
    %382 = vmatpush1.msra.mxu0 0.0
    %383 = vmatprep.subr.mxu0 0.0
    %384 = vmatpush1.msra.mxu0 0.0
    %385 = vmatprep.subr.mxu0 0.0
    %386 = vmatpush1.msra.mxu0 0.0
    %387 = vmatprep.subr.mxu0 0.0
    %388 = vmatpush1.msra.mxu0 0.0
    %389 = vmatprep.subr.mxu0 0.0
    %390 = vmatpush1.msra.mxu0 0.0
    %391 = vmatprep.subr.mxu0 0.0
    %392 = vmatpush1.msra.mxu0 0.0
    %393 = vmatprep.subr.mxu0 0.0
    %394 = vmatpush1.msra.mxu0 0.0
    %395 = vmatprep.subr.mxu0 0.0
    %396 = vmatpush1.msra.mxu0 0.0
    %397 = vmatprep.subr.mxu0 0.0
    %398 = vmatpush1.msra.mxu0 0.0
    %399 = vmatprep.subr.mxu0 0.0
    %400 = vmatpush1.msra.mxu0 0.0
    %401 = vmatprep.subr.mxu0 0.0
    %402 = vmatpush1.msra.mxu0 0.0
    %403 = vmatprep.subr.mxu0 0.0
    %404 = vmatpush1.msra.mxu0 0.0
    %405 = vmatprep.subr.mxu0 0.0
    %406 = vmatpush1.msra.mxu0 0.0
    %407 = vmatprep.subr.mxu0 0.0
    %408 = vmatpush1.msra.mxu0 0.0
    %409 = vmatprep.subr.mxu0 0.0
    %410 = vmatpush1.msra.mxu0 0.0
    %411 = vmatprep.subr.mxu0 0.0
    %412 = vmatpush1.msra.mxu0 0.0
    %413 = vmatprep.subr.mxu0 0.0
    %414 = vmatpush1.msra.mxu0 0.0
    %415 = vmatprep.subr.mxu0 0.0
    %416 = vmatpush1.msra.mxu0 0.0
    %417 = vmatprep.subr.mxu0 0.0
    %418 = vmatpush1.msra.mxu0 0.0
    %419 = vmatprep.mubr.f32.mxu0 0.0
    %420 = vmatmul.mubr.f32.gmra.mrb[0].mxu0 %v353
    %v421 = vpop.f32.mrb[0].mxu0
    %v422 = vadd.f32 %v351, %v421
    %v423 = vpop.f32.mrb[0].mxu0
    %424 = vdwg.mxu0
    %v425 = vtanh.pop %v422
    %v426 = vmul.f32 %v425, 0.5
    %v427 = vadd.f32 %v426, 0.5
    %v428 = vmul.f32 %v427, %v312
    %430 = vrot.lane.b32.xlu0 %v425, 64
    %v431 = vpop.permute.xlu0 %430
    %v433 = vmul.f32 %v427, %v431
    %435 = vrot.lane.b32.xlu0 %v433, 32
    %v436 = vpop.permute.xlu0 %435
    %v438 = vadd.f32 %v428, %v436
    %v439 = vtanh.pop %v438
    %441 = vrot.lane.b32.xlu0 %v439, 64
    %v442 = vpop.permute.xlu0 %441
    %v444 = vmul.f32 %v427, %v442
    %v445 = vld [vmem:[#allocation2 + $0x2] sm:$0x1]
    %v446 = vld [vmem:[#allocation2 + $0xa] sm:$0x1]
    %v447 = vld [vmem:[#allocation2 + $0x12] sm:$0x1]
    %v448 = vld [vmem:[#allocation2 + $0x1a] sm:$0x1]
    %v449 = vld [vmem:[#allocation2 + $0x22] sm:$0x1]
    %v450 = vld [vmem:[#allocation2 + $0x2a] sm:$0x1]
    %v451 = vld [vmem:[#allocation2 + $0x32] sm:$0x1]
    %v452 = vld [vmem:[#allocation2 + $0x3a] sm:$0x1]
    %454 = vrot.lane.b32.xlu0 %v444, 32
    %v455 = vpop.permute.xlu0 %454
    %v464 = vrot.slane %v446, 7
    %v465 = vsel %vm204, %v464, %v445
    %v466 = vrot.slane %v447, 6
    %v467 = vsel %vm207, %v466, %v465
    %v468 = vrot.slane %v448, 5
    %v469 = vsel %vm210, %v468, %v467
    %v470 = vrot.slane %v449, 4
    %v471 = vsel %vm213, %v470, %v469
    %v472 = vrot.slane %v450, 3
    %v473 = vsel %vm216, %v472, %v471
    %v474 = vrot.slane %v451, 2
    %v475 = vsel %vm219, %v474, %v473
    %v476 = vrot.slane %v452, 1
    %v477 = vsel %vm222, %v476, %v475
    %v479 = vsel %vm225, %v455, 0
    %481 = vmatprep.subr.mxu0 0.0
    %482 = vmatpush1.msra.mxu0 %v183
    %483 = vmatprep.subr.mxu0 0.0
    %484 = vmatpush1.msra.mxu0 %v184
    %485 = vmatprep.subr.mxu0 0.0
    %486 = vmatpush1.msra.mxu0 %v185
    %487 = vmatprep.subr.mxu0 0.0
    %488 = vmatpush1.msra.mxu0 %v186
    %489 = vmatprep.subr.mxu0 0.0
    %490 = vmatpush1.msra.mxu0 0.0
    %491 = vmatprep.subr.mxu0 0.0
    %492 = vmatpush1.msra.mxu0 0.0
    %493 = vmatprep.subr.mxu0 0.0
    %494 = vmatpush1.msra.mxu0 0.0
    %495 = vmatprep.subr.mxu0 0.0
    %496 = vmatpush1.msra.mxu0 0.0
    %497 = vmatprep.subr.mxu0 0.0
    %498 = vmatpush1.msra.mxu0 0.0
    %499 = vmatprep.subr.mxu0 0.0
    %500 = vmatpush1.msra.mxu0 0.0
    %501 = vmatprep.subr.mxu0 0.0
    %502 = vmatpush1.msra.mxu0 0.0
    %503 = vmatprep.subr.mxu0 0.0
    %504 = vmatpush1.msra.mxu0 0.0
    %505 = vmatprep.subr.mxu0 0.0
    %506 = vmatpush1.msra.mxu0 0.0
    %507 = vmatprep.subr.mxu0 0.0
    %508 = vmatpush1.msra.mxu0 0.0
    %509 = vmatprep.subr.mxu0 0.0
    %510 = vmatpush1.msra.mxu0 0.0
    %511 = vmatprep.subr.mxu0 0.0
    %512 = vmatpush1.msra.mxu0 0.0
    %513 = vmatprep.subr.mxu0 0.0
    %514 = vmatpush1.msra.mxu0 0.0
    %515 = vmatprep.subr.mxu0 0.0
    %516 = vmatpush1.msra.mxu0 0.0
    %517 = vmatprep.subr.mxu0 0.0
    %518 = vmatpush1.msra.mxu0 0.0
    %519 = vmatprep.subr.mxu0 0.0
    %520 = vmatpush1.msra.mxu0 0.0
    %521 = vmatprep.subr.mxu0 0.0
    %522 = vmatpush1.msra.mxu0 0.0
    %523 = vmatprep.subr.mxu0 0.0
    %524 = vmatpush1.msra.mxu0 0.0
    %525 = vmatprep.subr.mxu0 0.0
    %526 = vmatpush1.msra.mxu0 0.0
    %527 = vmatprep.subr.mxu0 0.0
    %528 = vmatpush1.msra.mxu0 0.0
    %529 = vmatprep.subr.mxu0 0.0
    %530 = vmatpush1.msra.mxu0 0.0
    %531 = vmatprep.subr.mxu0 0.0
    %532 = vmatpush1.msra.mxu0 0.0
    %533 = vmatprep.subr.mxu0 0.0
    %534 = vmatpush1.msra.mxu0 0.0
    %535 = vmatprep.subr.mxu0 0.0
    %536 = vmatpush1.msra.mxu0 0.0
    %537 = vmatprep.subr.mxu0 0.0
    %538 = vmatpush1.msra.mxu0 0.0
    %539 = vmatprep.subr.mxu0 0.0
    %540 = vmatpush1.msra.mxu0 0.0
    %541 = vmatprep.subr.mxu0 0.0
    %542 = vmatpush1.msra.mxu0 0.0
    %543 = vmatprep.subr.mxu0 0.0
    %544 = vmatpush1.msra.mxu0 0.0
    %545 = vmatprep.mubr.f32.mxu0 0.0
    %546 = vmatmul.mubr.f32.gmra.mrb[0].mxu0 %v479
    %v547 = vpop.f32.mrb[0].mxu0
    %v548 = vadd.f32 %v477, %v547
    %v549 = vpop.f32.mrb[0].mxu0
    %550 = vdwg.mxu0
    %v551 = vtanh.pop %v548
    %v552 = vmul.f32 %v551, 0.5
    %v553 = vadd.f32 %v552, 0.5
    %v554 = vmul.f32 %v553, %v438
    %556 = vrot.lane.b32.xlu0 %v551, 64
    %v557 = vpop.permute.xlu0 %556
    %v559 = vmul.f32 %v553, %v557
    %561 = vrot.lane.b32.xlu0 %v559, 32
    %v562 = vpop.permute.xlu0 %561
    %v564 = vadd.f32 %v554, %v562
    %v565 = vtanh.pop %v564
    %567 = vrot.lane.b32.xlu0 %v565, 64
    %v568 = vpop.permute.xlu0 %567
    %v570 = vmul.f32 %v553, %v568
    %v571 = vld [vmem:[#allocation2 + $0x3] sm:$0x1]
    %v572 = vld [vmem:[#allocation2 + $0xb] sm:$0x1]
    %v573 = vld [vmem:[#allocation2 + $0x13] sm:$0x1]
    %v574 = vld [vmem:[#allocation2 + $0x1b] sm:$0x1]
    %v575 = vld [vmem:[#allocation2 + $0x23] sm:$0x1]
    %v576 = vld [vmem:[#allocation2 + $0x2b] sm:$0x1]
    %v577 = vld [vmem:[#allocation2 + $0x33] sm:$0x1]
    %v578 = vld [vmem:[#allocation2 + $0x3b] sm:$0x1]
    %580 = vrot.lane.b32.xlu0 %v570, 32
    %v581 = vpop.permute.xlu0 %580
    %v590 = vrot.slane %v572, 7
    %v591 = vsel %vm204, %v590, %v571
    %v592 = vrot.slane %v573, 6
    %v593 = vsel %vm207, %v592, %v591
    %v594 = vrot.slane %v574, 5
    %v595 = vsel %vm210, %v594, %v593
    %v596 = vrot.slane %v575, 4
    %v597 = vsel %vm213, %v596, %v595
    %v598 = vrot.slane %v576, 3
    %v599 = vsel %vm216, %v598, %v597
    %v600 = vrot.slane %v577, 2
    %v601 = vsel %vm219, %v600, %v599
    %v602 = vrot.slane %v578, 1
    %v603 = vsel %vm222, %v602, %v601
    %v605 = vsel %vm225, %v581, 0
    %607 = vmatprep.subr.mxu0 0.0
    %608 = vmatpush1.msra.mxu0 %v183
    %609 = vmatprep.subr.mxu0 0.0
    %610 = vmatpush1.msra.mxu0 %v184
    %611 = vmatprep.subr.mxu0 0.0
    %612 = vmatpush1.msra.mxu0 %v185
    %613 = vmatprep.subr.mxu0 0.0
    %614 = vmatpush1.msra.mxu0 %v186
    %615 = vmatprep.subr.mxu0 0.0
    %616 = vmatpush1.msra.mxu0 0.0
    %617 = vmatprep.subr.mxu0 0.0
    %618 = vmatpush1.msra.mxu0 0.0
    %619 = vmatprep.subr.mxu0 0.0
    %620 = vmatpush1.msra.mxu0 0.0
    %621 = vmatprep.subr.mxu0 0.0
    %622 = vmatpush1.msra.mxu0 0.0
    %623 = vmatprep.subr.mxu0 0.0
    %624 = vmatpush1.msra.mxu0 0.0
    %625 = vmatprep.subr.mxu0 0.0
    %626 = vmatpush1.msra.mxu0 0.0
    %627 = vmatprep.subr.mxu0 0.0
    %628 = vmatpush1.msra.mxu0 0.0
    %629 = vmatprep.subr.mxu0 0.0
    %630 = vmatpush1.msra.mxu0 0.0
    %631 = vmatprep.subr.mxu0 0.0
    %632 = vmatpush1.msra.mxu0 0.0
    %633 = vmatprep.subr.mxu0 0.0
    %634 = vmatpush1.msra.mxu0 0.0
    %635 = vmatprep.subr.mxu0 0.0
    %636 = vmatpush1.msra.mxu0 0.0
    %637 = vmatprep.subr.mxu0 0.0
    %638 = vmatpush1.msra.mxu0 0.0
    %639 = vmatprep.subr.mxu0 0.0
    %640 = vmatpush1.msra.mxu0 0.0
    %641 = vmatprep.subr.mxu0 0.0
    %642 = vmatpush1.msra.mxu0 0.0
    %643 = vmatprep.subr.mxu0 0.0
    %644 = vmatpush1.msra.mxu0 0.0
    %645 = vmatprep.subr.mxu0 0.0
    %646 = vmatpush1.msra.mxu0 0.0
    %647 = vmatprep.subr.mxu0 0.0
    %648 = vmatpush1.msra.mxu0 0.0
    %649 = vmatprep.subr.mxu0 0.0
    %650 = vmatpush1.msra.mxu0 0.0
    %651 = vmatprep.subr.mxu0 0.0
    %652 = vmatpush1.msra.mxu0 0.0
    %653 = vmatprep.subr.mxu0 0.0
    %654 = vmatpush1.msra.mxu0 0.0
    %655 = vmatprep.subr.mxu0 0.0
    %656 = vmatpush1.msra.mxu0 0.0
    %657 = vmatprep.subr.mxu0 0.0
    %658 = vmatpush1.msra.mxu0 0.0
    %659 = vmatprep.subr.mxu0 0.0
    %660 = vmatpush1.msra.mxu0 0.0
    %661 = vmatprep.subr.mxu0 0.0
    %662 = vmatpush1.msra.mxu0 0.0
    %663 = vmatprep.subr.mxu0 0.0
    %664 = vmatpush1.msra.mxu0 0.0
    %665 = vmatprep.subr.mxu0 0.0
    %666 = vmatpush1.msra.mxu0 0.0
    %667 = vmatprep.subr.mxu0 0.0
    %668 = vmatpush1.msra.mxu0 0.0
    %669 = vmatprep.subr.mxu0 0.0
    %670 = vmatpush1.msra.mxu0 0.0
    %671 = vmatprep.mubr.f32.mxu0 0.0
    %672 = vmatmul.mubr.f32.gmra.mrb[0].mxu0 %v605
    %v673 = vpop.f32.mrb[0].mxu0
    %v674 = vadd.f32 %v603, %v673
    %v675 = vpop.f32.mrb[0].mxu0
    %676 = vdwg.mxu0
    %v677 = vtanh.pop %v674
    %v678 = vmul.f32 %v677, 0.5
    %v679 = vadd.f32 %v678, 0.5
    %v680 = vmul.f32 %v679, %v564
    %682 = vrot.lane.b32.xlu0 %v677, 64
    %v683 = vpop.permute.xlu0 %682
    %v685 = vmul.f32 %v679, %v683
    %687 = vrot.lane.b32.xlu0 %v685, 32
    %v688 = vpop.permute.xlu0 %687
    %v690 = vadd.f32 %v680, %v688
    %v691 = vtanh.pop %v690
    %693 = vrot.lane.b32.xlu0 %v691, 64
    %v694 = vpop.permute.xlu0 %693
    %v696 = vmul.f32 %v679, %v694
    %v697 = vld [vmem:[#allocation2 + $0x4] sm:$0x1]
    %v698 = vld [vmem:[#allocation2 + $0xc] sm:$0x1]
    %v699 = vld [vmem:[#allocation2 + $0x14] sm:$0x1]
    %v700 = vld [vmem:[#allocation2 + $0x1c] sm:$0x1]
    %v701 = vld [vmem:[#allocation2 + $0x24] sm:$0x1]
    %v702 = vld [vmem:[#allocation2 + $0x2c] sm:$0x1]
    %v703 = vld [vmem:[#allocation2 + $0x34] sm:$0x1]
    %v704 = vld [vmem:[#allocation2 + $0x3c] sm:$0x1]
    %706 = vrot.lane.b32.xlu0 %v696, 32
    %v707 = vpop.permute.xlu0 %706
    %v716 = vrot.slane %v698, 7
    %v717 = vsel %vm204, %v716, %v697
    %v718 = vrot.slane %v699, 6
    %v719 = vsel %vm207, %v718, %v717
    %v720 = vrot.slane %v700, 5
    %v721 = vsel %vm210, %v720, %v719
    %v722 = vrot.slane %v701, 4
    %v723 = vsel %vm213, %v722, %v721
    %v724 = vrot.slane %v702, 3
    %v725 = vsel %vm216, %v724, %v723
    %v726 = vrot.slane %v703, 2
    %v727 = vsel %vm219, %v726, %v725
    %v728 = vrot.slane %v704, 1
    %v729 = vsel %vm222, %v728, %v727
    %v731 = vsel %vm225, %v707, 0
    %733 = vmatprep.subr.mxu0 0.0
    %734 = vmatpush1.msra.mxu0 %v183
    %735 = vmatprep.subr.mxu0 0.0
    %736 = vmatpush1.msra.mxu0 %v184
    %737 = vmatprep.subr.mxu0 0.0
    %738 = vmatpush1.msra.mxu0 %v185
    %739 = vmatprep.subr.mxu0 0.0
    %740 = vmatpush1.msra.mxu0 %v186
    %741 = vmatprep.subr.mxu0 0.0
    %742 = vmatpush1.msra.mxu0 0.0
    %743 = vmatprep.subr.mxu0 0.0
    %744 = vmatpush1.msra.mxu0 0.0
    %745 = vmatprep.subr.mxu0 0.0
    %746 = vmatpush1.msra.mxu0 0.0
    %747 = vmatprep.subr.mxu0 0.0
    %748 = vmatpush1.msra.mxu0 0.0
    %749 = vmatprep.subr.mxu0 0.0
    %750 = vmatpush1.msra.mxu0 0.0
    %751 = vmatprep.subr.mxu0 0.0
    %752 = vmatpush1.msra.mxu0 0.0
    %753 = vmatprep.subr.mxu0 0.0
    %754 = vmatpush1.msra.mxu0 0.0
    %755 = vmatprep.subr.mxu0 0.0
    %756 = vmatpush1.msra.mxu0 0.0
    %757 = vmatprep.subr.mxu0 0.0
    %758 = vmatpush1.msra.mxu0 0.0
    %759 = vmatprep.subr.mxu0 0.0
    %760 = vmatpush1.msra.mxu0 0.0
    %761 = vmatprep.subr.mxu0 0.0
    %762 = vmatpush1.msra.mxu0 0.0
    %763 = vmatprep.subr.mxu0 0.0
    %764 = vmatpush1.msra.mxu0 0.0
    %765 = vmatprep.subr.mxu0 0.0
    %766 = vmatpush1.msra.mxu0 0.0
    %767 = vmatprep.subr.mxu0 0.0
    %768 = vmatpush1.msra.mxu0 0.0
    %769 = vmatprep.subr.mxu0 0.0
    %770 = vmatpush1.msra.mxu0 0.0
    %771 = vmatprep.subr.mxu0 0.0
    %772 = vmatpush1.msra.mxu0 0.0
    %773 = vmatprep.subr.mxu0 0.0
    %774 = vmatpush1.msra.mxu0 0.0
    %775 = vmatprep.subr.mxu0 0.0
    %776 = vmatpush1.msra.mxu0 0.0
    %777 = vmatprep.subr.mxu0 0.0
    %778 = vmatpush1.msra.mxu0 0.0
    %779 = vmatprep.subr.mxu0 0.0
    %780 = vmatpush1.msra.mxu0 0.0
    %781 = vmatprep.subr.mxu0 0.0
    %782 = vmatpush1.msra.mxu0 0.0
    %783 = vmatprep.subr.mxu0 0.0
    %784 = vmatpush1.msra.mxu0 0.0
    %785 = vmatprep.subr.mxu0 0.0
    %786 = vmatpush1.msra.mxu0 0.0
    %787 = vmatprep.subr.mxu0 0.0
    %788 = vmatpush1.msra.mxu0 0.0
    %789 = vmatprep.subr.mxu0 0.0
    %790 = vmatpush1.msra.mxu0 0.0
    %791 = vmatprep.subr.mxu0 0.0
    %792 = vmatpush1.msra.mxu0 0.0
    %793 = vmatprep.subr.mxu0 0.0
    %794 = vmatpush1.msra.mxu0 0.0
    %795 = vmatprep.subr.mxu0 0.0
    %796 = vmatpush1.msra.mxu0 0.0
    %797 = vmatprep.mubr.f32.mxu0 0.0
    %798 = vmatmul.mubr.f32.gmra.mrb[0].mxu0 %v731
    %v799 = vpop.f32.mrb[0].mxu0
    %v800 = vadd.f32 %v729, %v799
    %v801 = vpop.f32.mrb[0].mxu0
    %802 = vdwg.mxu0
    %v803 = vtanh.pop %v800
    %v804 = vmul.f32 %v803, 0.5
    %v805 = vadd.f32 %v804, 0.5
    %v806 = vmul.f32 %v805, %v690
    %808 = vrot.lane.b32.xlu0 %v803, 64
    %v809 = vpop.permute.xlu0 %808
    %v811 = vmul.f32 %v805, %v809
    %813 = vrot.lane.b32.xlu0 %v811, 32
    %v814 = vpop.permute.xlu0 %813
    %v816 = vadd.f32 %v806, %v814
    %v817 = vtanh.pop %v816
    %819 = vrot.lane.b32.xlu0 %v817, 64
    %v820 = vpop.permute.xlu0 %819
    %v822 = vmul.f32 %v805, %v820
    %v823 = vld [vmem:[#allocation2 + $0x5] sm:$0x1]
    %v824 = vld [vmem:[#allocation2 + $0xd] sm:$0x1]
    %v825 = vld [vmem:[#allocation2 + $0x15] sm:$0x1]
    %v826 = vld [vmem:[#allocation2 + $0x1d] sm:$0x1]
    %v827 = vld [vmem:[#allocation2 + $0x25] sm:$0x1]
    %v828 = vld [vmem:[#allocation2 + $0x2d] sm:$0x1]
    %v829 = vld [vmem:[#allocation2 + $0x35] sm:$0x1]
    %v830 = vld [vmem:[#allocation2 + $0x3d] sm:$0x1]
    %832 = vrot.lane.b32.xlu0 %v822, 32
    %v833 = vpop.permute.xlu0 %832
    %v842 = vrot.slane %v824, 7
    %v843 = vsel %vm204, %v842, %v823
    %v844 = vrot.slane %v825, 6
    %v845 = vsel %vm207, %v844, %v843
    %v846 = vrot.slane %v826, 5
    %v847 = vsel %vm210, %v846, %v845
    %v848 = vrot.slane %v827, 4
    %v849 = vsel %vm213, %v848, %v847
    %v850 = vrot.slane %v828, 3
    %v851 = vsel %vm216, %v850, %v849
    %v852 = vrot.slane %v829, 2
    %v853 = vsel %vm219, %v852, %v851
    %v854 = vrot.slane %v830, 1
    %v855 = vsel %vm222, %v854, %v853
    %v857 = vsel %vm225, %v833, 0
    %859 = vmatprep.subr.mxu0 0.0
    %860 = vmatpush1.msra.mxu0 %v183
    %861 = vmatprep.subr.mxu0 0.0
    %862 = vmatpush1.msra.mxu0 %v184
    %863 = vmatprep.subr.mxu0 0.0
    %864 = vmatpush1.msra.mxu0 %v185
    %865 = vmatprep.subr.mxu0 0.0
    %866 = vmatpush1.msra.mxu0 %v186
    %867 = vmatprep.subr.mxu0 0.0
    %868 = vmatpush1.msra.mxu0 0.0
    %869 = vmatprep.subr.mxu0 0.0
    %870 = vmatpush1.msra.mxu0 0.0
    %871 = vmatprep.subr.mxu0 0.0
    %872 = vmatpush1.msra.mxu0 0.0
    %873 = vmatprep.subr.mxu0 0.0
    %874 = vmatpush1.msra.mxu0 0.0
    %875 = vmatprep.subr.mxu0 0.0
    %876 = vmatpush1.msra.mxu0 0.0
    %877 = vmatprep.subr.mxu0 0.0
    %878 = vmatpush1.msra.mxu0 0.0
    %879 = vmatprep.subr.mxu0 0.0
    %880 = vmatpush1.msra.mxu0 0.0
    %881 = vmatprep.subr.mxu0 0.0
    %882 = vmatpush1.msra.mxu0 0.0
    %883 = vmatprep.subr.mxu0 0.0
    %884 = vmatpush1.msra.mxu0 0.0
    %885 = vmatprep.subr.mxu0 0.0
    %886 = vmatpush1.msra.mxu0 0.0
    %887 = vmatprep.subr.mxu0 0.0
    %888 = vmatpush1.msra.mxu0 0.0
    %889 = vmatprep.subr.mxu0 0.0
    %890 = vmatpush1.msra.mxu0 0.0
    %891 = vmatprep.subr.mxu0 0.0
    %892 = vmatpush1.msra.mxu0 0.0
    %893 = vmatprep.subr.mxu0 0.0
    %894 = vmatpush1.msra.mxu0 0.0
    %895 = vmatprep.subr.mxu0 0.0
    %896 = vmatpush1.msra.mxu0 0.0
    %897 = vmatprep.subr.mxu0 0.0
    %898 = vmatpush1.msra.mxu0 0.0
    %899 = vmatprep.subr.mxu0 0.0
    %900 = vmatpush1.msra.mxu0 0.0
    %901 = vmatprep.subr.mxu0 0.0
    %902 = vmatpush1.msra.mxu0 0.0
    %903 = vmatprep.subr.mxu0 0.0
    %904 = vmatpush1.msra.mxu0 0.0
    %905 = vmatprep.subr.mxu0 0.0
    %906 = vmatpush1.msra.mxu0 0.0
    %907 = vmatprep.subr.mxu0 0.0
    %908 = vmatpush1.msra.mxu0 0.0
    %909 = vmatprep.subr.mxu0 0.0
    %910 = vmatpush1.msra.mxu0 0.0
    %911 = vmatprep.subr.mxu0 0.0
    %912 = vmatpush1.msra.mxu0 0.0
    %913 = vmatprep.subr.mxu0 0.0
    %914 = vmatpush1.msra.mxu0 0.0
    %915 = vmatprep.subr.mxu0 0.0
    %916 = vmatpush1.msra.mxu0 0.0
    %917 = vmatprep.subr.mxu0 0.0
    %918 = vmatpush1.msra.mxu0 0.0
    %919 = vmatprep.subr.mxu0 0.0
    %920 = vmatpush1.msra.mxu0 0.0
    %921 = vmatprep.subr.mxu0 0.0
    %922 = vmatpush1.msra.mxu0 0.0
    %923 = vmatprep.mubr.f32.mxu0 0.0
    %924 = vmatmul.mubr.f32.gmra.mrb[0].mxu0 %v857
    %v925 = vpop.f32.mrb[0].mxu0
    %v926 = vadd.f32 %v855, %v925
    %v927 = vpop.f32.mrb[0].mxu0
    %928 = vdwg.mxu0
    %v929 = vtanh.pop %v926
    %v930 = vmul.f32 %v929, 0.5
    %v931 = vadd.f32 %v930, 0.5
    %v932 = vmul.f32 %v931, %v816
    %934 = vrot.lane.b32.xlu0 %v929, 64
    %v935 = vpop.permute.xlu0 %934
    %v937 = vmul.f32 %v931, %v935
    %939 = vrot.lane.b32.xlu0 %v937, 32
    %v940 = vpop.permute.xlu0 %939
    %v942 = vadd.f32 %v932, %v940
    %v943 = vtanh.pop %v942
    %945 = vrot.lane.b32.xlu0 %v943, 64
    %v946 = vpop.permute.xlu0 %945
    %v948 = vmul.f32 %v931, %v946
    %v949 = vld [vmem:[#allocation2 + $0x6] sm:$0x1]
    %v950 = vld [vmem:[#allocation2 + $0xe] sm:$0x1]
    %v951 = vld [vmem:[#allocation2 + $0x16] sm:$0x1]
    %v952 = vld [vmem:[#allocation2 + $0x1e] sm:$0x1]
    %v953 = vld [vmem:[#allocation2 + $0x26] sm:$0x1]
    %v954 = vld [vmem:[#allocation2 + $0x2e] sm:$0x1]
    %v955 = vld [vmem:[#allocation2 + $0x36] sm:$0x1]
    %v956 = vld [vmem:[#allocation2 + $0x3e] sm:$0x1]
    %958 = vrot.lane.b32.xlu0 %v948, 32
    %v959 = vpop.permute.xlu0 %958
    %v968 = vrot.slane %v950, 7
    %v969 = vsel %vm204, %v968, %v949
    %v970 = vrot.slane %v951, 6
    %v971 = vsel %vm207, %v970, %v969
    %v972 = vrot.slane %v952, 5
    %v973 = vsel %vm210, %v972, %v971
    %v974 = vrot.slane %v953, 4
    %v975 = vsel %vm213, %v974, %v973
    %v976 = vrot.slane %v954, 3
    %v977 = vsel %vm216, %v976, %v975
    %v978 = vrot.slane %v955, 2
    %v979 = vsel %vm219, %v978, %v977
    %v980 = vrot.slane %v956, 1
    %v981 = vsel %vm222, %v980, %v979
    %v983 = vsel %vm225, %v959, 0
    %985 = vmatprep.subr.mxu0 0.0
    %986 = vmatpush1.msra.mxu0 %v183
    %987 = vmatprep.subr.mxu0 0.0
    %988 = vmatpush1.msra.mxu0 %v184
    %989 = vmatprep.subr.mxu0 0.0
    %990 = vmatpush1.msra.mxu0 %v185
    %991 = vmatprep.subr.mxu0 0.0
    %992 = vmatpush1.msra.mxu0 %v186
    %993 = vmatprep.subr.mxu0 0.0
    %994 = vmatpush1.msra.mxu0 0.0
    %995 = vmatprep.subr.mxu0 0.0
    %996 = vmatpush1.msra.mxu0 0.0
    %997 = vmatprep.subr.mxu0 0.0
    %998 = vmatpush1.msra.mxu0 0.0
    %999 = vmatprep.subr.mxu0 0.0
    %1000 = vmatpush1.msra.mxu0 0.0
    %1001 = vmatprep.subr.mxu0 0.0
    %1002 = vmatpush1.msra.mxu0 0.0
    %1003 = vmatprep.subr.mxu0 0.0
    %1004 = vmatpush1.msra.mxu0 0.0
    %1005 = vmatprep.subr.mxu0 0.0
    %1006 = vmatpush1.msra.mxu0 0.0
    %1007 = vmatprep.subr.mxu0 0.0
    %1008 = vmatpush1.msra.mxu0 0.0
    %1009 = vmatprep.subr.mxu0 0.0
    %1010 = vmatpush1.msra.mxu0 0.0
    %1011 = vmatprep.subr.mxu0 0.0
    %1012 = vmatpush1.msra.mxu0 0.0
    %1013 = vmatprep.subr.mxu0 0.0
    %1014 = vmatpush1.msra.mxu0 0.0
    %1015 = vmatprep.subr.mxu0 0.0
    %1016 = vmatpush1.msra.mxu0 0.0
    %1017 = vmatprep.subr.mxu0 0.0
    %1018 = vmatpush1.msra.mxu0 0.0
    %1019 = vmatprep.subr.mxu0 0.0
    %1020 = vmatpush1.msra.mxu0 0.0
    %1021 = vmatprep.subr.mxu0 0.0
    %1022 = vmatpush1.msra.mxu0 0.0
    %1023 = vmatprep.subr.mxu0 0.0
    %1024 = vmatpush1.msra.mxu0 0.0
    %1025 = vmatprep.subr.mxu0 0.0
    %1026 = vmatpush1.msra.mxu0 0.0
    %1027 = vmatprep.subr.mxu0 0.0
    %1028 = vmatpush1.msra.mxu0 0.0
    %1029 = vmatprep.subr.mxu0 0.0
    %1030 = vmatpush1.msra.mxu0 0.0
    %1031 = vmatprep.subr.mxu0 0.0
    %1032 = vmatpush1.msra.mxu0 0.0
    %1033 = vmatprep.subr.mxu0 0.0
    %1034 = vmatpush1.msra.mxu0 0.0
    %1035 = vmatprep.subr.mxu0 0.0
    %1036 = vmatpush1.msra.mxu0 0.0
    %1037 = vmatprep.subr.mxu0 0.0
    %1038 = vmatpush1.msra.mxu0 0.0
    %1039 = vmatprep.subr.mxu0 0.0
    %1040 = vmatpush1.msra.mxu0 0.0
    %1041 = vmatprep.subr.mxu0 0.0
    %1042 = vmatpush1.msra.mxu0 0.0
    %1043 = vmatprep.subr.mxu0 0.0
    %1044 = vmatpush1.msra.mxu0 0.0
    %1045 = vmatprep.subr.mxu0 0.0
    %1046 = vmatpush1.msra.mxu0 0.0
    %1047 = vmatprep.subr.mxu0 0.0
    %1048 = vmatpush1.msra.mxu0 0.0
    %1049 = vmatprep.mubr.f32.mxu0 0.0
    %1050 = vmatmul.mubr.f32.gmra.mrb[0].mxu0 %v983
    %v1051 = vpop.f32.mrb[0].mxu0
    %v1052 = vadd.f32 %v981, %v1051
    %v1053 = vpop.f32.mrb[0].mxu0
    %1054 = vdwg.mxu0
    %v1055 = vtanh.pop %v1052
    %v1056 = vmul.f32 %v1055, 0.5
    %v1057 = vadd.f32 %v1056, 0.5
    %v1058 = vmul.f32 %v1057, %v942
    %1060 = vrot.lane.b32.xlu0 %v1055, 64
    %v1061 = vpop.permute.xlu0 %1060
    %v1063 = vmul.f32 %v1057, %v1061
    %1065 = vrot.lane.b32.xlu0 %v1063, 32
    %v1066 = vpop.permute.xlu0 %1065
    %v1068 = vadd.f32 %v1058, %v1066
    %v1069 = vtanh.pop %v1068
    %1071 = vrot.lane.b32.xlu0 %v1069, 64
    %v1072 = vpop.permute.xlu0 %1071
    %v1074 = vmul.f32 %v1057, %v1072
    %v1075 = vld [vmem:[#allocation2 + $0x7] sm:$0x1]
    %v1076 = vld [vmem:[#allocation2 + $0xf] sm:$0x1]
    %v1077 = vld [vmem:[#allocation2 + $0x17] sm:$0x1]
    %v1078 = vld [vmem:[#allocation2 + $0x1f] sm:$0x1]
    %v1079 = vld [vmem:[#allocation2 + $0x27] sm:$0x1]
    %v1080 = vld [vmem:[#allocation2 + $0x2f] sm:$0x1]
    %v1081 = vld [vmem:[#allocation2 + $0x37] sm:$0x1]
    %v1082 = vld [vmem:[#allocation2 + $0x3f] sm:$0x1]
    %1084 = vrot.lane.b32.xlu0 %v1074, 32
    %v1085 = vpop.permute.xlu0 %1084
    %v1094 = vrot.slane %v1076, 7
    %v1095 = vsel %vm204, %v1094, %v1075
    %v1096 = vrot.slane %v1077, 6
    %v1097 = vsel %vm207, %v1096, %v1095
    %v1098 = vrot.slane %v1078, 5
    %v1099 = vsel %vm210, %v1098, %v1097
    %v1100 = vrot.slane %v1079, 4
    %v1101 = vsel %vm213, %v1100, %v1099
    %v1102 = vrot.slane %v1080, 3
    %v1103 = vsel %vm216, %v1102, %v1101
    %v1104 = vrot.slane %v1081, 2
    %v1105 = vsel %vm219, %v1104, %v1103
    %v1106 = vrot.slane %v1082, 1
    %v1107 = vsel %vm222, %v1106, %v1105
    %v1109 = vsel %vm225, %v1085, 0
    %1111 = vmatprep.subr.mxu0 0.0
    %1112 = vmatpush1.msra.mxu0 %v183
    %1113 = vmatprep.subr.mxu0 0.0
    %1114 = vmatpush1.msra.mxu0 %v184
    %1115 = vmatprep.subr.mxu0 0.0
    %1116 = vmatpush1.msra.mxu0 %v185
    %1117 = vmatprep.subr.mxu0 0.0
    %1118 = vmatpush1.msra.mxu0 %v186
    %1119 = vmatprep.subr.mxu0 0.0
    %1120 = vmatpush1.msra.mxu0 0.0
    %1121 = vmatprep.subr.mxu0 0.0
    %1122 = vmatpush1.msra.mxu0 0.0
    %1123 = vmatprep.subr.mxu0 0.0
    %1124 = vmatpush1.msra.mxu0 0.0
    %1125 = vmatprep.subr.mxu0 0.0
    %1126 = vmatpush1.msra.mxu0 0.0
    %1127 = vmatprep.subr.mxu0 0.0
    %1128 = vmatpush1.msra.mxu0 0.0
    %1129 = vmatprep.subr.mxu0 0.0
    %1130 = vmatpush1.msra.mxu0 0.0
    %1131 = vmatprep.subr.mxu0 0.0
    %1132 = vmatpush1.msra.mxu0 0.0
    %1133 = vmatprep.subr.mxu0 0.0
    %1134 = vmatpush1.msra.mxu0 0.0
    %1135 = vmatprep.subr.mxu0 0.0
    %1136 = vmatpush1.msra.mxu0 0.0
    %1137 = vmatprep.subr.mxu0 0.0
    %1138 = vmatpush1.msra.mxu0 0.0
    %1139 = vmatprep.subr.mxu0 0.0
    %1140 = vmatpush1.msra.mxu0 0.0
    %1141 = vmatprep.subr.mxu0 0.0
    %1142 = vmatpush1.msra.mxu0 0.0
    %1143 = vmatprep.subr.mxu0 0.0
    %1144 = vmatpush1.msra.mxu0 0.0
    %1145 = vmatprep.subr.mxu0 0.0
    %1146 = vmatpush1.msra.mxu0 0.0
    %1147 = vmatprep.subr.mxu0 0.0
    %1148 = vmatpush1.msra.mxu0 0.0
    %1149 = vmatprep.subr.mxu0 0.0
    %1150 = vmatpush1.msra.mxu0 0.0
    %1151 = vmatprep.subr.mxu0 0.0
    %1152 = vmatpush1.msra.mxu0 0.0
    %1153 = vmatprep.subr.mxu0 0.0
    %1154 = vmatpush1.msra.mxu0 0.0
    %1155 = vmatprep.subr.mxu0 0.0
    %1156 = vmatpush1.msra.mxu0 0.0
    %1157 = vmatprep.subr.mxu0 0.0
    %1158 = vmatpush1.msra.mxu0 0.0
    %1159 = vmatprep.subr.mxu0 0.0
    %1160 = vmatpush1.msra.mxu0 0.0
    %1161 = vmatprep.subr.mxu0 0.0
    %1162 = vmatpush1.msra.mxu0 0.0
    %1163 = vmatprep.subr.mxu0 0.0
    %1164 = vmatpush1.msra.mxu0 0.0
    %1165 = vmatprep.subr.mxu0 0.0
    %1166 = vmatpush1.msra.mxu0 0.0
    %1167 = vmatprep.subr.mxu0 0.0
    %1168 = vmatpush1.msra.mxu0 0.0
    %1169 = vmatprep.subr.mxu0 0.0
    %1170 = vmatpush1.msra.mxu0 0.0
    %1171 = vmatprep.subr.mxu0 0.0
    %1172 = vmatpush1.msra.mxu0 0.0
    %1173 = vmatprep.subr.mxu0 0.0
    %1174 = vmatpush1.msra.mxu0 0.0
    %1175 = vmatprep.mubr.f32.mxu0 0.0
    %1176 = vmatmul.mubr.f32.gmra.mrb[0].mxu0 %v1109
    %v1177 = vpop.f32.mrb[0].mxu0
    %v1178 = vadd.f32 %v1107, %v1177
    %v1179 = vpop.f32.mrb[0].mxu0
    %1180 = vdwg.mxu0
    %v1181 = vtanh.pop %v1178
    %v1182 = vmul.f32 %v1181, 0.5
    %v1183 = vadd.f32 %v1182, 0.5
    %v1184 = vmul.f32 %v1183, %v1068
    %1186 = vrot.lane.b32.xlu0 %v1181, 64
    %v1187 = vpop.permute.xlu0 %1186
    %v1189 = vmul.f32 %v1183, %v1187
    %1191 = vrot.lane.b32.xlu0 %v1189, 32
    %v1192 = vpop.permute.xlu0 %1191
    %v1194 = vadd.f32 %v1184, %v1192
    %v1195 = vtanh.pop %v1194
    %1197 = vrot.lane.b32.xlu0 %v1195, 64
    %v1198 = vpop.permute.xlu0 %1197
    %v1200 = vmul.f32 %v1183, %v1198
    %v1201 = vld [vmem:[%s4] sm:$0x1]
    %s1202 = sld [smem:[#allocation3]]
    %v1203 = vstv %s1202
    %1205 = vrot.lane.b32.xlu0 %v1200, 32
    %v1206 = vpop.permute.xlu0 %1205
    %v1208 = vsel %vm225, %v1201, 0
    %v1210 = vsel %vm225, %v1206, 0
    %1212 = vmatprep.subr.mxu0 0.0
    %1213 = vmatpush1.xpose.msra.mxu0 %v1210
    %1214 = vmatprep.subr.mxu0 0.0
    %1215 = vmatpush1.xpose.msra.mxu0 0.0
    %1216 = vmatprep.subr.mxu0 0.0
    %1217 = vmatpush1.xpose.msra.mxu0 0.0
    %1218 = vmatprep.subr.mxu0 0.0
    %1219 = vmatpush1.xpose.msra.mxu0 0.0
    %1220 = vmatprep.subr.mxu0 0.0
    %1221 = vmatpush1.xpose.msra.mxu0 0.0
    %1222 = vmatprep.subr.mxu0 0.0
    %1223 = vmatpush1.xpose.msra.mxu0 0.0
    %1224 = vmatprep.subr.mxu0 0.0
    %1225 = vmatpush1.xpose.msra.mxu0 0.0
    %1226 = vmatprep.subr.mxu0 0.0
    %1227 = vmatpush1.xpose.msra.mxu0 0.0
    %1228 = vmatprep.subr.mxu0 0.0
    %1229 = vmatpush1.xpose.msra.mxu0 0.0
    %1230 = vmatprep.subr.mxu0 0.0
    %1231 = vmatpush1.xpose.msra.mxu0 0.0
    %1232 = vmatprep.subr.mxu0 0.0
    %1233 = vmatpush1.xpose.msra.mxu0 0.0
    %1234 = vmatprep.subr.mxu0 0.0
    %1235 = vmatpush1.xpose.msra.mxu0 0.0
    %1236 = vmatprep.subr.mxu0 0.0
    %1237 = vmatpush1.xpose.msra.mxu0 0.0
    %1238 = vmatprep.subr.mxu0 0.0
    %1239 = vmatpush1.xpose.msra.mxu0 0.0
    %1240 = vmatprep.subr.mxu0 0.0
    %1241 = vmatpush1.xpose.msra.mxu0 0.0
    %1242 = vmatprep.subr.mxu0 0.0
    %1243 = vmatpush1.xpose.msra.mxu0 0.0
    %1244 = vmatprep.subr.mxu0 0.0
    %1245 = vmatpush1.xpose.msra.mxu0 0.0
    %1246 = vmatprep.subr.mxu0 0.0
    %1247 = vmatpush1.xpose.msra.mxu0 0.0
    %1248 = vmatprep.subr.mxu0 0.0
    %1249 = vmatpush1.xpose.msra.mxu0 0.0
    %1250 = vmatprep.subr.mxu0 0.0
    %1251 = vmatpush1.xpose.msra.mxu0 0.0
    %1252 = vmatprep.subr.mxu0 0.0
    %1253 = vmatpush1.xpose.msra.mxu0 0.0
    %1254 = vmatprep.subr.mxu0 0.0
    %1255 = vmatpush1.xpose.msra.mxu0 0.0
    %1256 = vmatprep.subr.mxu0 0.0
    %1257 = vmatpush1.xpose.msra.mxu0 0.0
    %1258 = vmatprep.subr.mxu0 0.0
    %1259 = vmatpush1.xpose.msra.mxu0 0.0
    %1260 = vmatprep.subr.mxu0 0.0
    %1261 = vmatpush1.xpose.msra.mxu0 0.0
    %1262 = vmatprep.subr.mxu0 0.0
    %1263 = vmatpush1.xpose.msra.mxu0 0.0
    %1264 = vmatprep.subr.mxu0 0.0
    %1265 = vmatpush1.xpose.msra.mxu0 0.0
    %1266 = vmatprep.subr.mxu0 0.0
    %1267 = vmatpush1.xpose.msra.mxu0 0.0
    %1268 = vmatprep.subr.mxu0 0.0
    %1269 = vmatpush1.xpose.msra.mxu0 0.0
    %1270 = vmatprep.subr.mxu0 0.0
    %1271 = vmatpush1.xpose.msra.mxu0 0.0
    %1272 = vmatprep.subr.mxu0 0.0
    %1273 = vmatpush1.xpose.msra.mxu0 0.0
    %1274 = vmatprep.subr.mxu0 0.0
    %1275 = vmatpush1.xpose.msra.mxu0 0.0
    %1276 = vmatprep.mubr.f32.mxu0 0.0
    %1277 = vmatmul.mubr.f32.gmra.mrb[0].mxu0 %v1208
    %v1278 = vpop.f32.mrb[0].mxu0
    %v1279 = vadd.f32 %v1203, %v1278
    %v1280 = vpop.f32.mrb[0].mxu0
    %1281 = vdwg.mxu0
    %vm1282 = vcmask 57344
    %1283 = vst.msk [vmem:[#allocation4] sm:$0x1] %vm1282, %v1279
    // Predicated region
    $region26: #{tpu_custom_call.1} parent=1 // pred_check
      _
    $region27: #{tpu_custom_call.1} parent=1 // pred_check_branch
      %1285 = sbr.rel (0) target = $region29
    $region28: #{tpu_custom_call.1} parent=1 // pred_region
      %s1287 = ssub.s32 16, 16
      %1288 = vsyncadd [#allocation5], %s1287
      %s1290 = sshll.u32 [#allocation4], 4
      %s1291 = int_to_ptr.vmem [resolvable:$true] %s1290
      %1293 = dma.vmem_to_hbm [thread:$0]  %s1291, 16, %s6, [#allocation5]
    $region29: #{tpu_custom_call.1} parent=1 // pred_fallthru
      _
    // Predicated region
    $region30: #{tpu_custom_call.1} parent=1 // pred_check
      _
    $region31: #{tpu_custom_call.1} parent=1 // pred_check_branch
      %1295 = sbr.rel (0) target = $region33
    $region32: #{tpu_custom_call.1} parent=1 // pred_region
      %1296 = dma.done [#allocation5], 16
    $region33: #{tpu_custom_call.1} parent=1 // pred_fallthru
      _
    %1297 = vsyncpa [#allocation5], 1

</llo_original>
